<compile_context>
chip_gen: v6e
topology: v6e:2x2x1
jax: 0.10.0
libtpu: 0.0.40
codegen_flags: <defaults>
</compile_context>

<pallas_src>
import jax
import jax.numpy as jnp
from jax.experimental import pallas as pl
from jax.experimental.pallas import tpu as pltpu


def visibility_mlp_kernel(
    x_ref, d_ref,
    w1x_ref, w1d_ref, b1_ref,
    w2_ref, b2_ref,
    w3_ref, b3_ref,
    w4t_ref, b4_ref,
    o_ref,
):
    # bf16 operands feed the MXU fast path; accumulation stays f32.
    x = x_ref[...].astype(jnp.bfloat16)
    d = d_ref[...].astype(jnp.bfloat16)

    # Layer 1: fused concat -> linear -> relu (W1 split by input source).
    h = (
        jnp.dot(x, w1x_ref[...], preferred_element_type=jnp.float32)
        + jnp.dot(d, w1d_ref[...], preferred_element_type=jnp.float32)
        + b1_ref[...]
    )
    h = jnp.maximum(h, 0.0).astype(jnp.bfloat16)

    # Layer 2: linear -> relu
    h = jnp.dot(h, w2_ref[...], preferred_element_type=jnp.float32) + b2_ref[...]
    h = jnp.maximum(h, 0.0).astype(jnp.bfloat16)

    # Layer 3: linear -> relu
    h = jnp.dot(h, w3_ref[...], preferred_element_type=jnp.float32) + b3_ref[...]
    h = jnp.maximum(h, 0.0).astype(jnp.bfloat16)

    # Output layer, lane-dense: contract W4^T (dim_out, dim_z) against h's
    # feature axis (the q @ k.T "NT" pattern) -> (dim_out, tile_m), so the
    # batch dimension lands on lanes and the store is an unmasked vst.
    y = jax.lax.dot_general(
        w4t_ref[...], h,
        dimension_numbers=(((1,), (1,)), ((), ())),
        preferred_element_type=jnp.float32,
    ) + b4_ref[...]
    o_ref[...] = jax.nn.sigmoid(y).astype(o_ref.dtype)


def _pick_tile(n, tile_m):
    """Tile is a multiple of 128 (lane-dense output blocks), capped so the grid
    has >= 2 steps whenever the batch is large enough (v7x megacore)."""
    tile_m = max(128, (tile_m // 128) * 128)
    if n >= 256:
        half = -(-n // 2)                # ceil(n / 2)
        half = -(-half // 128) * 128     # round up to multiple of 128
        tile_m = min(tile_m, half)
    else:
        tile_m = 128
    return tile_m


def visibility_mlp(x_enc, d_enc, params, *, tile_m=1024):
    """params: W1x [pdim,dz], W1d [ddim,dz], b1 [1,dz], W2/W3 [dz,dz],
    b2/b3 [1,dz], W4T [dout,dz] (PyTorch Linear weight layout), b4 [dout,1]."""
    N, pdim = x_enc.shape
    Nd, ddim = d_enc.shape
    assert N == Nd
    dim_z = params["W2"].shape[0]
    dim_out = params["W4T"].shape[0]

    tile = _pick_tile(N, tile_m)
    n_pad = pl.cdiv(N, tile) * tile
    if n_pad != N:
        x_enc = jnp.pad(x_enc, ((0, n_pad - N), (0, 0)))
        d_enc = jnp.pad(d_enc, ((0, n_pad - N), (0, 0)))

    bf16 = lambda a: a.astype(jnp.bfloat16)   # weights only (tiny, one-time)
    full = lambda shape: pl.BlockSpec(shape, lambda i: (0, 0))

    grid_spec = pltpu.PrefetchScalarGridSpec(
        num_scalar_prefetch=0,
        grid=(n_pad // tile,),
        in_specs=[
            pl.BlockSpec((tile, pdim), lambda i: (i, 0)),
            pl.BlockSpec((tile, ddim), lambda i: (i, 0)),
            full((pdim, dim_z)),
            full((ddim, dim_z)),
            full((1, dim_z)),
            full((dim_z, dim_z)),
            full((1, dim_z)),
            full((dim_z, dim_z)),
            full((1, dim_z)),
            full((dim_out, dim_z)),
            full((dim_out, 1)),
        ],
        out_specs=pl.BlockSpec((dim_out, tile), lambda i: (0, i)),
    )

    matmul_macs = (pdim * dim_z + ddim * dim_z
                   + 2 * dim_z * dim_z + dim_z * dim_out)
    cost = pl.CostEstimate(
        flops=2 * n_pad * matmul_macs,
        transcendentals=n_pad * dim_out,                     # sigmoid exp
        bytes_accessed=(n_pad * (pdim + ddim) * x_enc.dtype.itemsize
                        + n_pad * dim_out * 4
                        + 2 * matmul_macs                    # bf16 weights
                        + 4 * (3 * dim_z + dim_out)),        # f32 biases
    )

    out_t = pl.pallas_call(
        visibility_mlp_kernel,
        out_shape=jax.ShapeDtypeStruct((dim_out, n_pad), jnp.float32),
        grid_spec=grid_spec,
        compiler_params=pltpu.CompilerParams(
            dimension_semantics=("parallel",),
            # Actual footprint is ~2 MiB at tile_m=1024; 32 MiB leaves ample
            # headroom on every generation (v5e default scoped is only 16 MiB,
            # v7x physical VMEM is 64 MiB).
            vmem_limit_bytes=32 * 1024 * 1024,
        ),
        cost_estimate=cost,
    )(
        x_enc, d_enc,
        bf16(params["W1x"]), bf16(params["W1d"]), params["b1"],
        bf16(params["W2"]), params["b2"],
        bf16(params["W3"]), params["b3"],
        bf16(params["W4T"]), params["b4"],
    )
    # (dim_out, n_pad) -> (N, dim_out); free relayout when dim_out == 1.
    return out_t.T[:N]


def init_params(key, posenc_dim, direnc_dim, dim_z, dim_out):
    """Deterministic synthetic init (shapes match nn.Linear params)."""
    input_dim = posenc_dim + direnc_dim
    ks = jax.random.split(key, 8)

    def lin(kw, kb, fan_in, fan_out):
        bound = 1.0 / jnp.sqrt(fan_in)
        w = jax.random.uniform(kw, (fan_in, fan_out), jnp.float32, -bound, bound)
        b = jax.random.uniform(kb, (1, fan_out), jnp.float32, -bound, bound)
        return w, b

    w1, b1 = lin(ks[0], ks[1], input_dim, dim_z)
    w2, b2 = lin(ks[2], ks[3], dim_z, dim_z)
    w3, b3 = lin(ks[4], ks[5], dim_z, dim_z)
    w4, b4 = lin(ks[6], ks[7], dim_z, dim_out)

    return {
        "W1x": w1[:posenc_dim],   # rows multiplying x_enc
        "W1d": w1[posenc_dim:],   # rows multiplying d_enc
        "b1": b1,
        "W2": w2, "b2": b2,
        "W3": w3, "b3": b3,
        "W4T": w4.T,              # (dim_out, dim_z)
        "b4": b4.T,               # (dim_out, 1)
    }


def reference_mlp(x_enc, d_enc, params):
    w1 = jnp.concatenate([params["W1x"], params["W1d"]], axis=0)
    h = jnp.concatenate([x_enc, d_enc], axis=1)
    h = jnp.maximum(h @ w1 + params["b1"], 0.0)
    h = jnp.maximum(h @ params["W2"] + params["b2"], 0.0)
    h = jnp.maximum(h @ params["W3"] + params["b3"], 0.0)
    return jax.nn.sigmoid(h @ params["W4T"].T + params["b4"].T)


if __name__ == "__main__":
    # Small deterministic example shapes.
    N = 512            # batch of ray samples
    posenc_dim = 32
    direnc_dim = 16
    dim_z = 64
    dim_out = 1

    key = jax.random.PRNGKey(0)
    kx, kd, kp = jax.random.split(key, 3)
    x_enc = jax.random.normal(kx, (N, posenc_dim), jnp.float32)
    d_enc = jax.random.normal(kd, (N, direnc_dim), jnp.float32)
    params = init_params(kp, posenc_dim, direnc_dim, dim_z, dim_out)

    out = visibility_mlp(x_enc, d_enc, params, tile_m=1024)
    out = jax.block_until_ready(out)

    ref = reference_mlp(x_enc, d_enc, params)
    assert out.shape == (N, dim_out)
    err = float(jnp.max(jnp.abs(out - ref)))
    # bf16 MXU operands with f32 accumulation -> loosened tolerance.
    assert err < 2e-2, f"max abs err {err}"

    print("KERNEL_OK")
</pallas_src>

<mosaic_0001>
module attributes {stable_mosaic.version = 11 : i64} {
  func.func @visibility_mlp_kernel(%arg0: i32, %arg1: memref<256x32xf32, #tpu.memory_space<vmem>>, %arg2: memref<256x16xf32, #tpu.memory_space<vmem>>, %arg3: memref<32x64xbf16, #tpu.memory_space<vmem>>, %arg4: memref<16x64xbf16, #tpu.memory_space<vmem>>, %arg5: memref<1x64xf32, #tpu.memory_space<vmem>>, %arg6: memref<64x64xbf16, #tpu.memory_space<vmem>>, %arg7: memref<1x64xf32, #tpu.memory_space<vmem>>, %arg8: memref<64x64xbf16, #tpu.memory_space<vmem>>, %arg9: memref<1x64xf32, #tpu.memory_space<vmem>>, %arg10: memref<1x64xbf16, #tpu.memory_space<vmem>>, %arg11: memref<1x1xf32, #tpu.memory_space<vmem>>, %arg12: memref<1x256xf32, #tpu.memory_space<vmem>>) attributes {dimension_semantics = [#tpu.dimension_semantics<parallel>], iteration_bounds = array<i64: 2>, scalar_prefetch = 0 : i64, scratch_operands = 0 : i64, tpu.core_type = #tpu.core_type<tc>, window_params = [{transform_indices = @transform_0, window_bounds = array<i64: 256, 32>}, {transform_indices = @transform_1, window_bounds = array<i64: 256, 16>}, {pipeline_mode = #tpu.pipeline_mode<synchronous>, transform_indices = @transform_2, window_bounds = array<i64: 32, 64>}, {pipeline_mode = #tpu.pipeline_mode<synchronous>, transform_indices = @transform_3, window_bounds = array<i64: 16, 64>}, {pipeline_mode = #tpu.pipeline_mode<synchronous>, transform_indices = @transform_4, window_bounds = array<i64: 1, 64>}, {pipeline_mode = #tpu.pipeline_mode<synchronous>, transform_indices = @transform_5, window_bounds = array<i64: 64, 64>}, {pipeline_mode = #tpu.pipeline_mode<synchronous>, transform_indices = @transform_6, window_bounds = array<i64: 1, 64>}, {pipeline_mode = #tpu.pipeline_mode<synchronous>, transform_indices = @transform_7, window_bounds = array<i64: 64, 64>}, {pipeline_mode = #tpu.pipeline_mode<synchronous>, transform_indices = @transform_8, window_bounds = array<i64: 1, 64>}, {pipeline_mode = #tpu.pipeline_mode<synchronous>, transform_indices = @transform_9, window_bounds = array<i64: 1, 64>}, {pipeline_mode = #tpu.pipeline_mode<synchronous>, transform_indices = @transform_10, window_bounds = array<i64: 1, 1>}, {transform_indices = @transform_11, window_bounds = array<i64: 1, 256>}]} {
    %c0 = arith.constant 0 : index
    %c0_0 = arith.constant 0 : index
    %0 = vector.load %arg1[%c0, %c0_0] : memref<256x32xf32, #tpu.memory_space<vmem>>, vector<256x32xf32>
    %1 = arith.truncf %0 : vector<256x32xf32> to vector<256x32xbf16>
    %c0_1 = arith.constant 0 : index
    %c0_2 = arith.constant 0 : index
    %2 = vector.load %arg2[%c0_1, %c0_2] : memref<256x16xf32, #tpu.memory_space<vmem>>, vector<256x16xf32>
    %3 = arith.truncf %2 : vector<256x16xf32> to vector<256x16xbf16>
    %c0_3 = arith.constant 0 : index
    %c0_4 = arith.constant 0 : index
    %4 = vector.load %arg3[%c0_3, %c0_4] : memref<32x64xbf16, #tpu.memory_space<vmem>>, vector<32x64xbf16>
    %cst = arith.constant dense<0.000000e+00> : vector<256x64xf32>
    %5 = tpu.matmul %1, %4, %cst {dimension_numbers = #tpu.dot_dimension_numbers<[1], [0], [0], [1], [0, 0, 1, 1], [], []>} : vector<256x32xbf16>, vector<32x64xbf16>, vector<256x64xf32> -> vector<256x64xf32>
    %c0_5 = arith.constant 0 : index
    %c0_6 = arith.constant 0 : index
    %6 = vector.load %arg4[%c0_5, %c0_6] : memref<16x64xbf16, #tpu.memory_space<vmem>>, vector<16x64xbf16>
    %cst_7 = arith.constant dense<0.000000e+00> : vector<256x64xf32>
    %7 = tpu.matmul %3, %6, %cst_7 {dimension_numbers = #tpu.dot_dimension_numbers<[1], [0], [0], [1], [0, 0, 1, 1], [], []>} : vector<256x16xbf16>, vector<16x64xbf16>, vector<256x64xf32> -> vector<256x64xf32>
    %8 = arith.addf %5, %7 : vector<256x64xf32>
    %c0_8 = arith.constant 0 : index
    %c0_9 = arith.constant 0 : index
    %9 = vector.load %arg5[%c0_8, %c0_9] : memref<1x64xf32, #tpu.memory_space<vmem>>, vector<1x64xf32>
    %10 = vector.broadcast %9 : vector<1x64xf32> to vector<256x64xf32>
    %11 = arith.addf %8, %10 : vector<256x64xf32>
    %cst_10 = arith.constant 0.000000e+00 : f32
    %12 = vector.broadcast %cst_10 : f32 to vector<256x64xf32>
    %13 = arith.maximumf %11, %12 : vector<256x64xf32>
    %14 = arith.truncf %13 : vector<256x64xf32> to vector<256x64xbf16>
    %c0_11 = arith.constant 0 : index
    %c0_12 = arith.constant 0 : index
    %15 = vector.load %arg6[%c0_11, %c0_12] : memref<64x64xbf16, #tpu.memory_space<vmem>>, vector<64x64xbf16>
    %cst_13 = arith.constant dense<0.000000e+00> : vector<256x64xf32>
    %16 = tpu.matmul %14, %15, %cst_13 {dimension_numbers = #tpu.dot_dimension_numbers<[1], [0], [0], [1], [0, 0, 1, 1], [], []>} : vector<256x64xbf16>, vector<64x64xbf16>, vector<256x64xf32> -> vector<256x64xf32>
    %c0_14 = arith.constant 0 : index
    %c0_15 = arith.constant 0 : index
    %17 = vector.load %arg7[%c0_14, %c0_15] : memref<1x64xf32, #tpu.memory_space<vmem>>, vector<1x64xf32>
    %18 = vector.broadcast %17 : vector<1x64xf32> to vector<256x64xf32>
    %19 = arith.addf %16, %18 : vector<256x64xf32>
    %cst_16 = arith.constant 0.000000e+00 : f32
    %20 = vector.broadcast %cst_16 : f32 to vector<256x64xf32>
    %21 = arith.maximumf %19, %20 : vector<256x64xf32>
    %22 = arith.truncf %21 : vector<256x64xf32> to vector<256x64xbf16>
    %c0_17 = arith.constant 0 : index
    %c0_18 = arith.constant 0 : index
    %23 = vector.load %arg8[%c0_17, %c0_18] : memref<64x64xbf16, #tpu.memory_space<vmem>>, vector<64x64xbf16>
    %cst_19 = arith.constant dense<0.000000e+00> : vector<256x64xf32>
    %24 = tpu.matmul %22, %23, %cst_19 {dimension_numbers = #tpu.dot_dimension_numbers<[1], [0], [0], [1], [0, 0, 1, 1], [], []>} : vector<256x64xbf16>, vector<64x64xbf16>, vector<256x64xf32> -> vector<256x64xf32>
    %c0_20 = arith.constant 0 : index
    %c0_21 = arith.constant 0 : index
    %25 = vector.load %arg9[%c0_20, %c0_21] : memref<1x64xf32, #tpu.memory_space<vmem>>, vector<1x64xf32>
    %26 = vector.broadcast %25 : vector<1x64xf32> to vector<256x64xf32>
    %27 = arith.addf %24, %26 : vector<256x64xf32>
    %cst_22 = arith.constant 0.000000e+00 : f32
    %28 = vector.broadcast %cst_22 : f32 to vector<256x64xf32>
    %29 = arith.maximumf %27, %28 : vector<256x64xf32>
    %30 = arith.truncf %29 : vector<256x64xf32> to vector<256x64xbf16>
    %c0_23 = arith.constant 0 : index
    %c0_24 = arith.constant 0 : index
    %31 = vector.load %arg10[%c0_23, %c0_24] : memref<1x64xbf16, #tpu.memory_space<vmem>>, vector<1x64xbf16>
    %cst_25 = arith.constant dense<0.000000e+00> : vector<1x256xf32>
    %32 = tpu.matmul %31, %30, %cst_25 {dimension_numbers = #tpu.dot_dimension_numbers<[1], [1], [0], [0], [0, 0, 1, 0], [], []>} : vector<1x64xbf16>, vector<256x64xbf16>, vector<1x256xf32> -> vector<1x256xf32>
    %c0_26 = arith.constant 0 : index
    %c0_27 = arith.constant 0 : index
    %33 = vector.load %arg11[%c0_26, %c0_27] : memref<1x1xf32, #tpu.memory_space<vmem>>, vector<1x1xf32>
    %34 = vector.broadcast %33 : vector<1x1xf32> to vector<1x256xf32>
    %35 = arith.addf %32, %34 : vector<1x256xf32>
    %36 = arith.negf %35 : vector<1x256xf32>
    %37 = math.exp %36 : vector<1x256xf32>
    %cst_28 = arith.constant 1.000000e+00 : f32
    %38 = vector.broadcast %cst_28 : f32 to vector<1x256xf32>
    %39 = arith.addf %38, %37 : vector<1x256xf32>
    %40 = arith.divf %38, %39 : vector<1x256xf32>
    %c0_29 = arith.constant 0 : index
    %c0_30 = arith.constant 0 : index
    %41 = vector.load %arg12[%c0_29, %c0_30] : memref<1x256xf32, #tpu.memory_space<vmem>>, vector<1x256xf32>
    tpu.vector_store %arg12[%c0_29, %c0_30], %40 {strides = array<i32>} : memref<1x256xf32, #tpu.memory_space<vmem>>, vector<1x256xf32>,
    return
  }
  func.func @transform_0(%arg0: i32) -> (i32, i32) {
    %c0_i32 = arith.constant 0 : i32
    %c0_i32_0 = arith.constant 0 : i32
    return %arg0, %c0_i32 : i32, i32
  }
  func.func @transform_1(%arg0: i32) -> (i32, i32) {
    %c0_i32 = arith.constant 0 : i32
    %c0_i32_0 = arith.constant 0 : i32
    return %arg0, %c0_i32 : i32, i32
  }
  func.func @transform_2(%arg0: i32) -> (i32, i32) {
    %c0_i32 = arith.constant 0 : i32
    %c0_i32_0 = arith.constant 0 : i32
    %c0_i32_1 = arith.constant 0 : i32
    return %c0_i32, %c0_i32_0 : i32, i32
  }
  func.func @transform_3(%arg0: i32) -> (i32, i32) {
    %c0_i32 = arith.constant 0 : i32
    %c0_i32_0 = arith.constant 0 : i32
    %c0_i32_1 = arith.constant 0 : i32
    return %c0_i32, %c0_i32_0 : i32, i32
  }
  func.func @transform_4(%arg0: i32) -> (i32, i32) {
    %c0_i32 = arith.constant 0 : i32
    %c0_i32_0 = arith.constant 0 : i32
    %c0_i32_1 = arith.constant 0 : i32
    return %c0_i32, %c0_i32_0 : i32, i32
  }
  func.func @transform_5(%arg0: i32) -> (i32, i32) {
    %c0_i32 = arith.constant 0 : i32
    %c0_i32_0 = arith.constant 0 : i32
    %c0_i32_1 = arith.constant 0 : i32
    return %c0_i32, %c0_i32_0 : i32, i32
  }
  func.func @transform_6(%arg0: i32) -> (i32, i32) {
    %c0_i32 = arith.constant 0 : i32
    %c0_i32_0 = arith.constant 0 : i32
    %c0_i32_1 = arith.constant 0 : i32
    return %c0_i32, %c0_i32_0 : i32, i32
  }
  func.func @transform_7(%arg0: i32) -> (i32, i32) {
    %c0_i32 = arith.constant 0 : i32
    %c0_i32_0 = arith.constant 0 : i32
    %c0_i32_1 = arith.constant 0 : i32
    return %c0_i32, %c0_i32_0 : i32, i32
  }
  func.func @transform_8(%arg0: i32) -> (i32, i32) {
    %c0_i32 = arith.constant 0 : i32
    %c0_i32_0 = arith.constant 0 : i32
    %c0_i32_1 = arith.constant 0 : i32
    return %c0_i32, %c0_i32_0 : i32, i32
  }
  func.func @transform_9(%arg0: i32) -> (i32, i32) {
    %c0_i32 = arith.constant 0 : i32
    %c0_i32_0 = arith.constant 0 : i32
    %c0_i32_1 = arith.constant 0 : i32
    return %c0_i32, %c0_i32_0 : i32, i32
  }
  func.func @transform_10(%arg0: i32) -> (i32, i32) {
    %c0_i32 = arith.constant 0 : i32
    %c0_i32_0 = arith.constant 0 : i32
    %c0_i32_1 = arith.constant 0 : i32
    return %c0_i32, %c0_i32_0 : i32, i32
  }
  func.func @transform_11(%arg0: i32) -> (i32, i32) {
    %c0_i32 = arith.constant 0 : i32
    %c0_i32_0 = arith.constant 0 : i32
    return %c0_i32, %arg0 : i32, i32
  }
}

</mosaic_0001>

<llo_original>
// kernel: tpu_custom_call.1
$region0: #{tpu_custom_call.1}
  #allocation0 [shape = 'u32[]', space=smem, size = 0x4, offset = 0x4, fixed_abs, tag = 'smem constant byte address 0x4 - core index']
  #allocation1 [shape = 'u32[144,128]{1,0:T(1,128)}', space=vmem, size = 0x12000, scoped, tag = 'internal scratch']
  #allocation2 [shape = 'f32[1,1]{1,0:T(1,128)S(1)}', space=vmem, size = 0x200, scoped, tag = 'scoped memory for tpu_custom_call.1']
  %s0 = inlined_call_operand.vmem [shape: f32[512,32], index: 0, kind: input, shape index: {}]
  %s1 = inlined_call_operand.vmem [shape: f32[512,16], index: 1, kind: input, shape index: {}]
  %s2 = inlined_call_operand.vmem [shape: bf16[32,64], index: 2, kind: input, shape index: {}]
  %s3 = inlined_call_operand.vmem [shape: bf16[16,64], index: 3, kind: input, shape index: {}]
  %s4 = inlined_call_operand.vmem [shape: f32[1,64], index: 4, kind: input, shape index: {}]
  %s5 = inlined_call_operand.vmem [shape: bf16[64,64], index: 5, kind: input, shape index: {}]
  %s6 = inlined_call_operand.vmem [shape: f32[1,64], index: 6, kind: input, shape index: {}]
  %s7 = inlined_call_operand.vmem [shape: bf16[64,64], index: 7, kind: input, shape index: {}]
  %s8 = inlined_call_operand.vmem [shape: f32[1,64], index: 8, kind: input, shape index: {}]
  %s9 = inlined_call_operand.vmem [shape: bf16[1,64], index: 9, kind: input, shape index: {}]
  %s10 = inlined_call_operand.<no memory space> [shape: f32[1,1], index: 10, kind: input, shape index: {}]
  %s11 = inlined_call_operand.hbm [shape: f32[1,512], index: 11, kind: output, shape index: {}]
  %s12 = sld [smem:[#allocation0]]
  $region77: #{tpu_custom_call.1} parent=0
    _
  %s14 = ssub.s32 1, %s12
  %s15 = scalar_select 0, %s14, %s12
  %v16 = vstv %s10
  %17 = vst [vmem:[#allocation2] sm:$0x1] %v16
  $region1: #{tpu_custom_call.1} parent=0
    #allocation3 [shape = 'u8[2048]{0}', space=vmem, size = 0x800, scoped, tag = 'output window, operand 0']
    #allocation4 [shape = 's32[2]{0}', space=sflag, size = 0x8, scoped, tag = 'scoped memory for tpu_custom_call.1']
    %18 = vsyncpa [#allocation4], 0
    %s19 = scalar_lea.sflag [#allocation4], 1
    %20 = vsyncpa %s19, 0
    loop: start=0, step=1, limit=4
    $region2: #{tpu_custom_call.1} parent=1 // loop_pre_header
      _
    $region3: #{tpu_custom_call.1} parent=1 // loop_header
      %s22 = sphi 0, %s26
      %p23 = scmp.ge.s32.totalorder %s22, 4
      %s32 = sphi 0, %s34
      %s35 = sphi 0, %s32
      %s36 = sphi 0, %s35
      %s52 = sphi 0, %s36
      %s58 = sphi 0, %s60
      %s61 = sphi 0, %s58
      %s62 = sphi 0, %s61
      %s78 = sphi 0, %s62
      %s82 = sphi 0, %s82
      %s84 = sphi 0, %s82
      %s85 = sphi 0, %s84
      %s99 = sphi 0, %s85
      %s103 = sphi 0, %s103
      %s105 = sphi 0, %s103
      %s106 = sphi 0, %s105
      %s120 = sphi 0, %s106
      %s124 = sphi 0, %s124
      %s126 = sphi 0, %s124
      %s127 = sphi 0, %s126
      %s141 = sphi 0, %s127
      %s145 = sphi 0, %s145
      %s147 = sphi 0, %s145
      %s148 = sphi 0, %s147
      %s162 = sphi 0, %s148
      %s166 = sphi 0, %s166
      %s168 = sphi 0, %s166
      %s169 = sphi 0, %s168
      %s183 = sphi 0, %s169
      %s187 = sphi 0, %s187
      %s189 = sphi 0, %s187
      %s190 = sphi 0, %s189
      %s204 = sphi 0, %s190
      %s208 = sphi 0, %s208
      %s210 = sphi 0, %s208
      %s211 = sphi 0, %s210
      %s225 = sphi 0, %s211
      %s229 = sphi 0, %s229
      %s231 = sphi 0, %s229
      %s232 = sphi 0, %s231
      %s246 = sphi 0, %s232
      %s250 = sphi 0, %s250
      %s252 = sphi 0, %s250
      %s253 = sphi 0, %s252
      %s267 = sphi 0, %s253
      %s273 = sphi 0, %s275
      %s276 = sphi 0, %s273
      %s277 = sphi 0, %s276
      %s293 = sphi 0, %s277
    $region4: #{tpu_custom_call.1} parent=1 // loop_header_branch
      %25 = sbr.rel (%p23) target = $region8
    $region5: #{tpu_custom_call.1} parent=1 // loop_body
      %s27 = ssub.s32 %s22, 1
      %s28 = ssub.s32 %s22, 2
      %s29 = sadd.s32 %s22, 1
      %s30 = ssub.s32 %s22, %s29
      %p31 = scmp.eq.s32.totalorder %s30, 0
      %s33 = sadd.s32 %s32, 1
      %s34 = scalar_select %p31, %s32, %s33
      %p37 = pneg %p31
      %p38 = scmp.eq.s32.totalorder %s22, 1
      %p39 = por %p37, %p38
      %p40 = scmp.ne.s32.totalorder %s32, %s35
      %p41 = scmp.eq.s32.totalorder %s22, 0
      %p42 = por %p40, %p41
      %p43 = scmp.ne.s32.totalorder %s32, %s35
      %p44 = scmp.eq.s32.totalorder %s27, 1
      %p45 = por %p43, %p44
      %p46 = scmp.ne.s32.totalorder %s35, %s36
      %p47 = scmp.eq.s32.totalorder %s27, 0
      %p48 = por %p46, %p47
      %p49 = scmp.ne.s32.totalorder %s35, %s36
      %p50 = scmp.eq.s32.totalorder %s28, 1
      %p51 = por %p49, %p50
      %p53 = scmp.ne.s32.totalorder %s36, %s52
      %p54 = scmp.eq.s32.totalorder %s28, 0
      %p55 = por %p53, %p54
      %s56 = ssub.s32 %s22, %s29
      %p57 = scmp.eq.s32.totalorder %s56, 0
      %s59 = sadd.s32 %s58, 1
      %s60 = scalar_select %p57, %s58, %s59
      %p63 = pneg %p57
      %p64 = scmp.eq.s32.totalorder %s22, 1
      %p65 = por %p63, %p64
      %p66 = scmp.ne.s32.totalorder %s58, %s61
      %p67 = scmp.eq.s32.totalorder %s22, 0
      %p68 = por %p66, %p67
      %p69 = scmp.ne.s32.totalorder %s58, %s61
      %p70 = scmp.eq.s32.totalorder %s27, 1
      %p71 = por %p69, %p70
      %p72 = scmp.ne.s32.totalorder %s61, %s62
      %p73 = scmp.eq.s32.totalorder %s27, 0
      %p74 = por %p72, %p73
      %p75 = scmp.ne.s32.totalorder %s61, %s62
      %p76 = scmp.eq.s32.totalorder %s28, 1
      %p77 = por %p75, %p76
      %p79 = scmp.ne.s32.totalorder %s62, %s78
      %p80 = scmp.eq.s32.totalorder %s28, 0
      %p81 = por %p79, %p80
      %s83 = sadd.s32 %s82, 1
      %p86 = scmp.eq.s32.totalorder %s22, 1
      %p87 = scmp.ne.s32.totalorder %s82, %s84
      %p88 = scmp.eq.s32.totalorder %s22, 0
      %p89 = por %p87, %p88
      %p90 = scmp.ne.s32.totalorder %s82, %s84
      %p91 = scmp.eq.s32.totalorder %s27, 1
      %p92 = por %p90, %p91
      %p93 = scmp.ne.s32.totalorder %s84, %s85
      %p94 = scmp.eq.s32.totalorder %s27, 0
      %p95 = por %p93, %p94
      %p96 = scmp.ne.s32.totalorder %s84, %s85
      %p97 = scmp.eq.s32.totalorder %s28, 1
      %p98 = por %p96, %p97
      %p100 = scmp.ne.s32.totalorder %s85, %s99
      %p101 = scmp.eq.s32.totalorder %s28, 0
      %p102 = por %p100, %p101
      %s104 = sadd.s32 %s103, 1
      %p107 = scmp.eq.s32.totalorder %s22, 1
      %p108 = scmp.ne.s32.totalorder %s103, %s105
      %p109 = scmp.eq.s32.totalorder %s22, 0
      %p110 = por %p108, %p109
      %p111 = scmp.ne.s32.totalorder %s103, %s105
      %p112 = scmp.eq.s32.totalorder %s27, 1
      %p113 = por %p111, %p112
      %p114 = scmp.ne.s32.totalorder %s105, %s106
      %p115 = scmp.eq.s32.totalorder %s27, 0
      %p116 = por %p114, %p115
      %p117 = scmp.ne.s32.totalorder %s105, %s106
      %p118 = scmp.eq.s32.totalorder %s28, 1
      %p119 = por %p117, %p118
      %p121 = scmp.ne.s32.totalorder %s106, %s120
      %p122 = scmp.eq.s32.totalorder %s28, 0
      %p123 = por %p121, %p122
      %s125 = sadd.s32 %s124, 1
      %p128 = scmp.eq.s32.totalorder %s22, 1
      %p129 = scmp.ne.s32.totalorder %s124, %s126
      %p130 = scmp.eq.s32.totalorder %s22, 0
      %p131 = por %p129, %p130
      %p132 = scmp.ne.s32.totalorder %s124, %s126
      %p133 = scmp.eq.s32.totalorder %s27, 1
      %p134 = por %p132, %p133
      %p135 = scmp.ne.s32.totalorder %s126, %s127
      %p136 = scmp.eq.s32.totalorder %s27, 0
      %p137 = por %p135, %p136
      %p138 = scmp.ne.s32.totalorder %s126, %s127
      %p139 = scmp.eq.s32.totalorder %s28, 1
      %p140 = por %p138, %p139
      %p142 = scmp.ne.s32.totalorder %s127, %s141
      %p143 = scmp.eq.s32.totalorder %s28, 0
      %p144 = por %p142, %p143
      %s146 = sadd.s32 %s145, 1
      %p149 = scmp.eq.s32.totalorder %s22, 1
      %p150 = scmp.ne.s32.totalorder %s145, %s147
      %p151 = scmp.eq.s32.totalorder %s22, 0
      %p152 = por %p150, %p151
      %p153 = scmp.ne.s32.totalorder %s145, %s147
      %p154 = scmp.eq.s32.totalorder %s27, 1
      %p155 = por %p153, %p154
      %p156 = scmp.ne.s32.totalorder %s147, %s148
      %p157 = scmp.eq.s32.totalorder %s27, 0
      %p158 = por %p156, %p157
      %p159 = scmp.ne.s32.totalorder %s147, %s148
      %p160 = scmp.eq.s32.totalorder %s28, 1
      %p161 = por %p159, %p160
      %p163 = scmp.ne.s32.totalorder %s148, %s162
      %p164 = scmp.eq.s32.totalorder %s28, 0
      %p165 = por %p163, %p164
      %s167 = sadd.s32 %s166, 1
      %p170 = scmp.eq.s32.totalorder %s22, 1
      %p171 = scmp.ne.s32.totalorder %s166, %s168
      %p172 = scmp.eq.s32.totalorder %s22, 0
      %p173 = por %p171, %p172
      %p174 = scmp.ne.s32.totalorder %s166, %s168
      %p175 = scmp.eq.s32.totalorder %s27, 1
      %p176 = por %p174, %p175
      %p177 = scmp.ne.s32.totalorder %s168, %s169
      %p178 = scmp.eq.s32.totalorder %s27, 0
      %p179 = por %p177, %p178
      %p180 = scmp.ne.s32.totalorder %s168, %s169
      %p181 = scmp.eq.s32.totalorder %s28, 1
      %p182 = por %p180, %p181
      %p184 = scmp.ne.s32.totalorder %s169, %s183
      %p185 = scmp.eq.s32.totalorder %s28, 0
      %p186 = por %p184, %p185
      %s188 = sadd.s32 %s187, 1
      %p191 = scmp.eq.s32.totalorder %s22, 1
      %p192 = scmp.ne.s32.totalorder %s187, %s189
      %p193 = scmp.eq.s32.totalorder %s22, 0
      %p194 = por %p192, %p193
      %p195 = scmp.ne.s32.totalorder %s187, %s189
      %p196 = scmp.eq.s32.totalorder %s27, 1
      %p197 = por %p195, %p196
      %p198 = scmp.ne.s32.totalorder %s189, %s190
      %p199 = scmp.eq.s32.totalorder %s27, 0
      %p200 = por %p198, %p199
      %p201 = scmp.ne.s32.totalorder %s189, %s190
      %p202 = scmp.eq.s32.totalorder %s28, 1
      %p203 = por %p201, %p202
      %p205 = scmp.ne.s32.totalorder %s190, %s204
      %p206 = scmp.eq.s32.totalorder %s28, 0
      %p207 = por %p205, %p206
      %s209 = sadd.s32 %s208, 1
      %p212 = scmp.eq.s32.totalorder %s22, 1
      %p213 = scmp.ne.s32.totalorder %s208, %s210
      %p214 = scmp.eq.s32.totalorder %s22, 0
      %p215 = por %p213, %p214
      %p216 = scmp.ne.s32.totalorder %s208, %s210
      %p217 = scmp.eq.s32.totalorder %s27, 1
      %p218 = por %p216, %p217
      %p219 = scmp.ne.s32.totalorder %s210, %s211
      %p220 = scmp.eq.s32.totalorder %s27, 0
      %p221 = por %p219, %p220
      %p222 = scmp.ne.s32.totalorder %s210, %s211
      %p223 = scmp.eq.s32.totalorder %s28, 1
      %p224 = por %p222, %p223
      %p226 = scmp.ne.s32.totalorder %s211, %s225
      %p227 = scmp.eq.s32.totalorder %s28, 0
      %p228 = por %p226, %p227
      %s230 = sadd.s32 %s229, 1
      %p233 = scmp.eq.s32.totalorder %s22, 1
      %p234 = scmp.ne.s32.totalorder %s229, %s231
      %p235 = scmp.eq.s32.totalorder %s22, 0
      %p236 = por %p234, %p235
      %p237 = scmp.ne.s32.totalorder %s229, %s231
      %p238 = scmp.eq.s32.totalorder %s27, 1
      %p239 = por %p237, %p238
      %p240 = scmp.ne.s32.totalorder %s231, %s232
      %p241 = scmp.eq.s32.totalorder %s27, 0
      %p242 = por %p240, %p241
      %p243 = scmp.ne.s32.totalorder %s231, %s232
      %p244 = scmp.eq.s32.totalorder %s28, 1
      %p245 = por %p243, %p244
      %p247 = scmp.ne.s32.totalorder %s232, %s246
      %p248 = scmp.eq.s32.totalorder %s28, 0
      %p249 = por %p247, %p248
      %s251 = sadd.s32 %s250, 1
      %p254 = scmp.eq.s32.totalorder %s22, 1
      %p255 = scmp.ne.s32.totalorder %s250, %s252
      %p256 = scmp.eq.s32.totalorder %s22, 0
      %p257 = por %p255, %p256
      %p258 = scmp.ne.s32.totalorder %s250, %s252
      %p259 = scmp.eq.s32.totalorder %s27, 1
      %p260 = por %p258, %p259
      %p261 = scmp.ne.s32.totalorder %s252, %s253
      %p262 = scmp.eq.s32.totalorder %s27, 0
      %p263 = por %p261, %p262
      %p264 = scmp.ne.s32.totalorder %s252, %s253
      %p265 = scmp.eq.s32.totalorder %s28, 1
      %p266 = por %p264, %p265
      %p268 = scmp.ne.s32.totalorder %s253, %s267
      %p269 = scmp.eq.s32.totalorder %s28, 0
      %p270 = por %p268, %p269
      %s271 = ssub.s32 %s22, %s29
      %p272 = scmp.eq.s32.totalorder %s271, 0
      %s274 = sadd.s32 %s273, 1
      %s275 = scalar_select %p272, %s273, %s274
      %p278 = pneg %p272
      %p279 = scmp.eq.s32.totalorder %s22, 1
      %p280 = por %p278, %p279
      %p281 = scmp.ne.s32.totalorder %s273, %s276
      %p282 = scmp.eq.s32.totalorder %s22, 0
      %p283 = por %p281, %p282
      %p284 = scmp.ne.s32.totalorder %s273, %s276
      %p285 = scmp.eq.s32.totalorder %s27, 1
      %p286 = por %p284, %p285
      %p287 = scmp.ne.s32.totalorder %s276, %s277
      %p288 = scmp.eq.s32.totalorder %s27, 0
      %p289 = por %p287, %p288
      %p290 = scmp.ne.s32.totalorder %s276, %s277
      %p291 = scmp.eq.s32.totalorder %s28, 1
      %p292 = por %p290, %p291
      %p294 = scmp.ne.s32.totalorder %s277, %s293
      %p295 = scmp.eq.s32.totalorder %s28, 0
      %p296 = por %p294, %p295
      %p297 = scmp.le.s32.totalorder 1, %s22
      %p298 = scmp.lt.s32.totalorder %s22, 3
      %p299 = pnand %p297, %p298
      %p300 = pneg %p299
      // Predicated region
      $region9: #{tpu_custom_call.1} parent=5 // pred_check
        _
      $region10: #{tpu_custom_call.1} parent=5 // pred_check_branch
        %302 = sbr.rel (%p299) target = $region12
      $region11: #{tpu_custom_call.1} parent=5 // pred_region
        %s303 = ssub.s32 %s22, 1
        // Predicated region
        $region13: #{tpu_custom_call.1} parent=11 // pred_check
          %p304 = pneg %p95
        $region14: #{tpu_custom_call.1} parent=11 // pred_check_branch
          %306 = sbr.rel (%p304) target = $region16
        $region15: #{tpu_custom_call.1} parent=11 // pred_region
          _
        $region16: #{tpu_custom_call.1} parent=11 // pred_fallthru
          _
        // Predicated region
        $region17: #{tpu_custom_call.1} parent=11 // pred_check
          %p307 = pneg %p116
        $region18: #{tpu_custom_call.1} parent=11 // pred_check_branch
          %309 = sbr.rel (%p307) target = $region20
        $region19: #{tpu_custom_call.1} parent=11 // pred_region
          _
        $region20: #{tpu_custom_call.1} parent=11 // pred_fallthru
          _
        // Predicated region
        $region21: #{tpu_custom_call.1} parent=11 // pred_check
          %p310 = pneg %p137
        $region22: #{tpu_custom_call.1} parent=11 // pred_check_branch
          %312 = sbr.rel (%p310) target = $region24
        $region23: #{tpu_custom_call.1} parent=11 // pred_region
          _
        $region24: #{tpu_custom_call.1} parent=11 // pred_fallthru
          _
        // Predicated region
        $region25: #{tpu_custom_call.1} parent=11 // pred_check
          %p313 = pneg %p158
        $region26: #{tpu_custom_call.1} parent=11 // pred_check_branch
          %315 = sbr.rel (%p313) target = $region28
        $region27: #{tpu_custom_call.1} parent=11 // pred_region
          _
        $region28: #{tpu_custom_call.1} parent=11 // pred_fallthru
          _
        // Predicated region
        $region29: #{tpu_custom_call.1} parent=11 // pred_check
          %p316 = pneg %p179
        $region30: #{tpu_custom_call.1} parent=11 // pred_check_branch
          %318 = sbr.rel (%p316) target = $region32
        $region31: #{tpu_custom_call.1} parent=11 // pred_region
          _
        $region32: #{tpu_custom_call.1} parent=11 // pred_fallthru
          _
        // Predicated region
        $region33: #{tpu_custom_call.1} parent=11 // pred_check
          %p319 = pneg %p200
        $region34: #{tpu_custom_call.1} parent=11 // pred_check_branch
          %321 = sbr.rel (%p319) target = $region36
        $region35: #{tpu_custom_call.1} parent=11 // pred_region
          _
        $region36: #{tpu_custom_call.1} parent=11 // pred_fallthru
          _
        // Predicated region
        $region37: #{tpu_custom_call.1} parent=11 // pred_check
          %p322 = pneg %p221
        $region38: #{tpu_custom_call.1} parent=11 // pred_check_branch
          %324 = sbr.rel (%p322) target = $region40
        $region39: #{tpu_custom_call.1} parent=11 // pred_region
          _
        $region40: #{tpu_custom_call.1} parent=11 // pred_fallthru
          _
        // Predicated region
        $region41: #{tpu_custom_call.1} parent=11 // pred_check
          %p325 = pneg %p242
        $region42: #{tpu_custom_call.1} parent=11 // pred_check_branch
          %327 = sbr.rel (%p325) target = $region44
        $region43: #{tpu_custom_call.1} parent=11 // pred_region
          _
        $region44: #{tpu_custom_call.1} parent=11 // pred_fallthru
          _
        // Predicated region
        $region45: #{tpu_custom_call.1} parent=11 // pred_check
          %p328 = pneg %p263
        $region46: #{tpu_custom_call.1} parent=11 // pred_check_branch
          %330 = sbr.rel (%p328) target = $region48
        $region47: #{tpu_custom_call.1} parent=11 // pred_region
          _
        $region48: #{tpu_custom_call.1} parent=11 // pred_fallthru
          _
      $region12: #{tpu_custom_call.1} parent=5 // pred_fallthru
        _
      %p331 = scmp.lt.s32.totalorder %s22, 2
      // Predicated region
      $region49: #{tpu_custom_call.1} parent=5 // pred_check
        %p332 = pneg %p331
      $region50: #{tpu_custom_call.1} parent=5 // pred_check_branch
        %334 = sbr.rel (%p332) target = $region52
      $region51: #{tpu_custom_call.1} parent=5 // pred_region
        // Predicated region
        $region53: #{tpu_custom_call.1} parent=51 // pred_check
          %p335 = pneg %p42
        $region54: #{tpu_custom_call.1} parent=51 // pred_check_branch
          %337 = sbr.rel (%p335) target = $region56
        $region55: #{tpu_custom_call.1} parent=51 // pred_region
          %s338 = smul.u32 32, %s22
          %p339 = scmp.lt.s32.totalorder %s338, 63
          %s340 = scalar_select %p339, %s338, 63
          %s341 = smul.addr %s340, 8
          %s342 = scalar_lea.vmem %s0, %s341
          %s343 = smul.u32 32, %s22
        $region56: #{tpu_custom_call.1} parent=51 // pred_fallthru
          _
        // Predicated region
        $region57: #{tpu_custom_call.1} parent=51 // pred_check
          %p344 = pneg %p68
        $region58: #{tpu_custom_call.1} parent=51 // pred_check_branch
          %346 = sbr.rel (%p344) target = $region60
        $region59: #{tpu_custom_call.1} parent=51 // pred_region
          %s347 = smul.u32 32, %s22
          %p348 = scmp.lt.s32.totalorder %s347, 63
          %s349 = scalar_select %p348, %s347, 63
          %s350 = smul.addr %s349, 8
          %s351 = scalar_lea.vmem %s1, %s350
          %s352 = smul.u32 32, %s22
        $region60: #{tpu_custom_call.1} parent=51 // pred_fallthru
          _
      $region52: #{tpu_custom_call.1} parent=5 // pred_fallthru
        _
      %p353 = scmp.le.s32.totalorder 1, %s22
      %p354 = scmp.lt.s32.totalorder %s22, 3
      %p355 = pnand %p353, %p354
      %p356 = pneg %p355
      // Predicated region
      $region61: #{tpu_custom_call.1} parent=5 // pred_check
        _
      $region62: #{tpu_custom_call.1} parent=5 // pred_check_branch
        %358 = sbr.rel (%p355) target = $region64
      $region63: #{tpu_custom_call.1} parent=5 // pred_region
        %s359 = ssub.s32 %s22, 1
        %s360 = smul.u32 32, %s27
        %p361 = scmp.lt.s32.totalorder %s360, 63
        %s362 = scalar_select %p361, %s360, 63
        %s363 = smul.addr %s362, 8
        %s364 = scalar_lea.vmem %s0, %s363
        %p365 = pneg %p48
        %p366 = pneg %p45
        %s367 = smul.u32 32, %s27
        %p368 = scmp.lt.s32.totalorder %s367, 63
        %s369 = scalar_select %p368, %s367, 63
        %s370 = smul.addr %s369, 8
        %s371 = scalar_lea.vmem %s1, %s370
        %p372 = pneg %p74
        %p373 = pneg %p71
        %p374 = pneg %p95
        %p375 = pneg %p92
        %p376 = pneg %p116
        %p377 = pneg %p113
        %p378 = pneg %p137
        %p379 = pneg %p134
        %p380 = pneg %p158
        %p381 = pneg %p155
        %p382 = pneg %p179
        %p383 = pneg %p176
        %p384 = pneg %p200
        %p385 = pneg %p197
        %p386 = pneg %p221
        %p387 = pneg %p218
        %p388 = pneg %p242
        %p389 = pneg %p239
        %p390 = pneg %p263
        %p391 = pneg %p260
        %p392 = pneg %p289
        %p393 = pneg %p286
        %s394 = sand.u32 %s276, 1
        %s395 = scalar_lea.sflag [#allocation4], %s394
        %s396 = sand.u32 %s276, 1
        %s397 = smul.addr %s396, 2
        %s398 = scalar_lea.vmem [#allocation3], %s397
        %s399 = smul.u32 32, %s27
        %p400 = scmp.lt.s32.totalorder %s399, 63
        %s401 = scalar_select %p400, %s399, 63
        %s402 = smul.addr %s401, 8
        %s403 = scalar_lea.vmem %s0, %s402
        %s404 = smul.u32 32, %s27
        %s405 = smul.u32 32, %s27
        %p406 = scmp.lt.s32.totalorder %s405, 63
        %s407 = scalar_select %p406, %s405, 63
        %s408 = smul.addr %s407, 8
        %s409 = scalar_lea.vmem %s1, %s408
        %s410 = smul.u32 32, %s27
        %s411 = smul.u32 2, %s27
        %v413 = vld [vmem:[%s403] sm:$0xff]
        %v414 = vld [vmem:[%s403 + $0x8] sm:$0xff]
        %v415 = vld [vmem:[%s403 + $0x10] sm:$0xff]
        %v416 = vld [vmem:[%s403 + $0x18] sm:$0xff]
        %v417 = vld [vmem:[%s403 + $0x20] sm:$0xff]
        %v418 = vld [vmem:[%s403 + $0x28] sm:$0xff]
        %v419 = vld [vmem:[%s403 + $0x30] sm:$0xff]
        %v420 = vld [vmem:[%s403 + $0x38] sm:$0xff]
        %v421 = vld [vmem:[%s403 + $0x40] sm:$0xff]
        %v422 = vld [vmem:[%s403 + $0x48] sm:$0xff]
        %v423 = vld [vmem:[%s403 + $0x50] sm:$0xff]
        %v424 = vld [vmem:[%s403 + $0x58] sm:$0xff]
        %v425 = vld [vmem:[%s403 + $0x60] sm:$0xff]
        %v426 = vld [vmem:[%s403 + $0x68] sm:$0xff]
        %v427 = vld [vmem:[%s403 + $0x70] sm:$0xff]
        %v428 = vld [vmem:[%s403 + $0x78] sm:$0xff]
        %v429 = vld [vmem:[%s403 + $0x80] sm:$0xff]
        %v430 = vld [vmem:[%s403 + $0x88] sm:$0xff]
        %v431 = vld [vmem:[%s403 + $0x90] sm:$0xff]
        %v432 = vld [vmem:[%s403 + $0x98] sm:$0xff]
        %v433 = vld [vmem:[%s403 + $0xa0] sm:$0xff]
        %v434 = vld [vmem:[%s403 + $0xa8] sm:$0xff]
        %v435 = vld [vmem:[%s403 + $0xb0] sm:$0xff]
        %v436 = vld [vmem:[%s403 + $0xb8] sm:$0xff]
        %v437 = vld [vmem:[%s403 + $0xc0] sm:$0xff]
        %v438 = vld [vmem:[%s403 + $0xc8] sm:$0xff]
        %v439 = vld [vmem:[%s403 + $0xd0] sm:$0xff]
        %v440 = vld [vmem:[%s403 + $0xd8] sm:$0xff]
        %v441 = vld [vmem:[%s403 + $0xe0] sm:$0xff]
        %v442 = vld [vmem:[%s403 + $0xe8] sm:$0xff]
        %v443 = vld [vmem:[%s403 + $0xf0] sm:$0xff]
        %v444 = vld [vmem:[%s403 + $0xf8] sm:$0xff]
        %v445 = vpack.c.bf16 %v414, %v413
        %v446 = vpack.c.bf16 %v416, %v415
        %v447 = vpack.c.bf16 %v418, %v417
        %v448 = vpack.c.bf16 %v420, %v419
        %v449 = vpack.c.bf16 %v422, %v421
        %v450 = vpack.c.bf16 %v424, %v423
        %v451 = vpack.c.bf16 %v426, %v425
        %v452 = vpack.c.bf16 %v428, %v427
        %v453 = vpack.c.bf16 %v430, %v429
        %v454 = vpack.c.bf16 %v432, %v431
        %v455 = vpack.c.bf16 %v434, %v433
        %v456 = vpack.c.bf16 %v436, %v435
        %v457 = vpack.c.bf16 %v438, %v437
        %v458 = vpack.c.bf16 %v440, %v439
        %v459 = vpack.c.bf16 %v442, %v441
        %v460 = vpack.c.bf16 %v444, %v443
        %v461 = vld [vmem:[%s409] sm:$0xff]
        %v462 = vld [vmem:[%s409 + $0x8] sm:$0xff]
        %v463 = vld [vmem:[%s409 + $0x10] sm:$0xff]
        %v464 = vld [vmem:[%s409 + $0x18] sm:$0xff]
        %v465 = vld [vmem:[%s409 + $0x20] sm:$0xff]
        %v466 = vld [vmem:[%s409 + $0x28] sm:$0xff]
        %v467 = vld [vmem:[%s409 + $0x30] sm:$0xff]
        %v468 = vld [vmem:[%s409 + $0x38] sm:$0xff]
        %v469 = vld [vmem:[%s409 + $0x40] sm:$0xff]
        %v470 = vld [vmem:[%s409 + $0x48] sm:$0xff]
        %v471 = vld [vmem:[%s409 + $0x50] sm:$0xff]
        %v472 = vld [vmem:[%s409 + $0x58] sm:$0xff]
        %v473 = vld [vmem:[%s409 + $0x60] sm:$0xff]
        %v474 = vld [vmem:[%s409 + $0x68] sm:$0xff]
        %v475 = vld [vmem:[%s409 + $0x70] sm:$0xff]
        %v476 = vld [vmem:[%s409 + $0x78] sm:$0xff]
        %v477 = vld [vmem:[%s409 + $0x80] sm:$0xff]
        %v478 = vld [vmem:[%s409 + $0x88] sm:$0xff]
        %v479 = vld [vmem:[%s409 + $0x90] sm:$0xff]
        %v480 = vld [vmem:[%s409 + $0x98] sm:$0xff]
        %v481 = vld [vmem:[%s409 + $0xa0] sm:$0xff]
        %v482 = vld [vmem:[%s409 + $0xa8] sm:$0xff]
        %v483 = vld [vmem:[%s409 + $0xb0] sm:$0xff]
        %v484 = vld [vmem:[%s409 + $0xb8] sm:$0xff]
        %v485 = vld [vmem:[%s409 + $0xc0] sm:$0xff]
        %v486 = vld [vmem:[%s409 + $0xc8] sm:$0xff]
        %v487 = vld [vmem:[%s409 + $0xd0] sm:$0xff]
        %v488 = vld [vmem:[%s409 + $0xd8] sm:$0xff]
        %v489 = vld [vmem:[%s409 + $0xe0] sm:$0xff]
        %v490 = vld [vmem:[%s409 + $0xe8] sm:$0xff]
        %v491 = vld [vmem:[%s409 + $0xf0] sm:$0xff]
        %v492 = vld [vmem:[%s409 + $0xf8] sm:$0xff]
        %v493 = vpack.c.bf16 %v462, %v461
        %v494 = vpack.c.bf16 %v464, %v463
        %v495 = vpack.c.bf16 %v466, %v465
        %v496 = vpack.c.bf16 %v468, %v467
        %v497 = vpack.c.bf16 %v470, %v469
        %v498 = vpack.c.bf16 %v472, %v471
        %v499 = vpack.c.bf16 %v474, %v473
        %v500 = vpack.c.bf16 %v476, %v475
        %v501 = vpack.c.bf16 %v478, %v477
        %v502 = vpack.c.bf16 %v480, %v479
        %v503 = vpack.c.bf16 %v482, %v481
        %v504 = vpack.c.bf16 %v484, %v483
        %v505 = vpack.c.bf16 %v486, %v485
        %v506 = vpack.c.bf16 %v488, %v487
        %v507 = vpack.c.bf16 %v490, %v489
        %v508 = vpack.c.bf16 %v492, %v491
        %v509 = vld [vmem:[%s2] sm:$0xf]
        %v510 = vld [vmem:[%s2 + $0x4] sm:$0xf]
        %v511 = vld [vmem:[%s2 + $0x8] sm:$0xf]
        %v512 = vld [vmem:[%s2 + $0xc] sm:$0xf]
        %v513 = vld [vmem:[%s3] sm:$0xf]
        %v514 = vld [vmem:[%s3 + $0x4] sm:$0xf]
        %v517 = vunpack.c.l.b16 %v513
        %v518 = vunpack.c.l.b16 %v514
        %v519 = vpack.c.b16 %v518, %v517
        %vm521 = vcmask 130048
        %v523 = vsel %vm521, %v493, 0
        %v526 = vsel %vm521, %v494, 0
        %v529 = vsel %vm521, %v495, 0
        %v532 = vsel %vm521, %v496, 0
        %v535 = vsel %vm521, %v497, 0
        %v538 = vsel %vm521, %v498, 0
        %v541 = vsel %vm521, %v499, 0
        %v544 = vsel %vm521, %v500, 0
        %v547 = vsel %vm521, %v501, 0
        %v550 = vsel %vm521, %v502, 0
        %v553 = vsel %vm521, %v503, 0
        %v556 = vsel %vm521, %v504, 0
        %v559 = vsel %vm521, %v505, 0
        %v562 = vsel %vm521, %v506, 0
        %v565 = vsel %vm521, %v507, 0
        %v568 = vsel %vm521, %v508, 0
        %570 = vmatprep.subr.bf16.mxu0 0
        %571 = vmatpush1.bf16.msra.mxu0 0
        %572 = vmatprep.subr.bf16.mxu0 0
        %573 = vmatpush1.bf16.msra.mxu0 0
        %574 = vmatprep.subr.bf16.mxu0 0
        %575 = vmatpush1.bf16.msra.mxu0 0
        %576 = vmatprep.subr.bf16.mxu0 0
        %577 = vmatpush1.bf16.msra.mxu0 0
        %578 = vmatprep.subr.bf16.mxu0 0
        %579 = vmatpush1.bf16.msra.mxu0 0
        %580 = vmatprep.subr.bf16.mxu0 0
        %581 = vmatpush1.bf16.msra.mxu0 0
        %582 = vmatprep.subr.bf16.mxu0 0
        %583 = vmatpush1.bf16.msra.mxu0 0
        %584 = vmatprep.subr.bf16.mxu0 0
        %585 = vmatpush1.bf16.msra.mxu0 %v519
        %586 = vmatprep.subr.bf16.mxu0 0
        %587 = vmatpush2.bf16.msra.mxu0 0
        %588 = vmatprep.subr.bf16.mxu0 0
        %589 = vmatpush2.bf16.msra.mxu0 0
        %590 = vmatprep.subr.bf16.mxu0 0
        %591 = vmatpush2.bf16.msra.mxu0 0
        %592 = vmatprep.subr.bf16.mxu0 0
        %593 = vmatpush2.bf16.msra.mxu0 0
        %594 = vmatprep.subr.bf16.mxu0 0
        %595 = vmatpush2.bf16.msra.mxu0 0
        %596 = vmatprep.subr.bf16.mxu0 0
        %597 = vmatpush2.bf16.msra.mxu0 0
        %598 = vmatprep.subr.bf16.mxu0 0
        %599 = vmatpush2.bf16.msra.mxu0 0
        %600 = vmatprep.subr.bf16.mxu0 0
        %601 = vmatpush2.bf16.msra.mxu0 0
        %602 = vmatprep.mubr.bf16.mxu0 0
        %603 = vmatmul.mubr.bf16.gmra.mxu0 %v523
        %v604 = vpop.f32.mrf.mxu0
        %v605 = vadd.f32 0.0, %v604
        %v606 = vpop.f32.mrf.mxu0
        %v607 = vpop.f32.mrf.mxu0
        %v608 = vadd.f32 0.0, %v607
        %v609 = vpop.f32.mrf.mxu0
        %610 = vmatprep.mubr.bf16.mxu0 0
        %611 = vmatmul.mubr.bf16.gmra.mxu0 %v526
        %v612 = vpop.f32.mrf.mxu0
        %v613 = vadd.f32 0.0, %v612
        %v614 = vpop.f32.mrf.mxu0
        %v615 = vpop.f32.mrf.mxu0
        %v616 = vadd.f32 0.0, %v615
        %v617 = vpop.f32.mrf.mxu0
        %618 = vmatprep.mubr.bf16.mxu0 0
        %619 = vmatmul.mubr.bf16.gmra.mxu0 %v529
        %v620 = vpop.f32.mrf.mxu0
        %v621 = vadd.f32 0.0, %v620
        %v622 = vpop.f32.mrf.mxu0
        %v623 = vpop.f32.mrf.mxu0
        %v624 = vadd.f32 0.0, %v623
        %v625 = vpop.f32.mrf.mxu0
        %626 = vmatprep.mubr.bf16.mxu0 0
        %627 = vmatmul.mubr.bf16.gmra.mxu0 %v532
        %v628 = vpop.f32.mrf.mxu0
        %v629 = vadd.f32 0.0, %v628
        %v630 = vpop.f32.mrf.mxu0
        %v631 = vpop.f32.mrf.mxu0
        %v632 = vadd.f32 0.0, %v631
        %v633 = vpop.f32.mrf.mxu0
        %634 = vmatprep.mubr.bf16.mxu0 0
        %635 = vmatmul.mubr.bf16.gmra.mxu0 %v535
        %v636 = vpop.f32.mrf.mxu0
        %v637 = vadd.f32 0.0, %v636
        %v638 = vpop.f32.mrf.mxu0
        %v639 = vpop.f32.mrf.mxu0
        %v640 = vadd.f32 0.0, %v639
        %v641 = vpop.f32.mrf.mxu0
        %642 = vmatprep.mubr.bf16.mxu0 0
        %643 = vmatmul.mubr.bf16.gmra.mxu0 %v538
        %v644 = vpop.f32.mrf.mxu0
        %v645 = vadd.f32 0.0, %v644
        %v646 = vpop.f32.mrf.mxu0
        %v647 = vpop.f32.mrf.mxu0
        %v648 = vadd.f32 0.0, %v647
        %v649 = vpop.f32.mrf.mxu0
        %650 = vmatprep.mubr.bf16.mxu0 0
        %651 = vmatmul.mubr.bf16.gmra.mxu0 %v541
        %v652 = vpop.f32.mrf.mxu0
        %v653 = vadd.f32 0.0, %v652
        %v654 = vpop.f32.mrf.mxu0
        %v655 = vpop.f32.mrf.mxu0
        %v656 = vadd.f32 0.0, %v655
        %v657 = vpop.f32.mrf.mxu0
        %658 = vmatprep.mubr.bf16.mxu0 0
        %659 = vmatmul.mubr.bf16.gmra.mxu0 %v544
        %v660 = vpop.f32.mrf.mxu0
        %v661 = vadd.f32 0.0, %v660
        %v662 = vpop.f32.mrf.mxu0
        %v663 = vpop.f32.mrf.mxu0
        %v664 = vadd.f32 0.0, %v663
        %v665 = vpop.f32.mrf.mxu0
        %666 = vmatprep.mubr.bf16.mxu0 0
        %667 = vmatmul.mubr.bf16.gmra.mxu0 %v547
        %v668 = vpop.f32.mrf.mxu0
        %v669 = vadd.f32 0.0, %v668
        %v670 = vpop.f32.mrf.mxu0
        %v671 = vpop.f32.mrf.mxu0
        %v672 = vadd.f32 0.0, %v671
        %v673 = vpop.f32.mrf.mxu0
        %674 = vmatprep.mubr.bf16.mxu0 0
        %675 = vmatmul.mubr.bf16.gmra.mxu0 %v550
        %v676 = vpop.f32.mrf.mxu0
        %v677 = vadd.f32 0.0, %v676
        %v678 = vpop.f32.mrf.mxu0
        %v679 = vpop.f32.mrf.mxu0
        %v680 = vadd.f32 0.0, %v679
        %v681 = vpop.f32.mrf.mxu0
        %682 = vmatprep.mubr.bf16.mxu0 0
        %683 = vmatmul.mubr.bf16.gmra.mxu0 %v553
        %v684 = vpop.f32.mrf.mxu0
        %v685 = vadd.f32 0.0, %v684
        %v686 = vpop.f32.mrf.mxu0
        %v687 = vpop.f32.mrf.mxu0
        %v688 = vadd.f32 0.0, %v687
        %v689 = vpop.f32.mrf.mxu0
        %690 = vmatprep.mubr.bf16.mxu0 0
        %691 = vmatmul.mubr.bf16.gmra.mxu0 %v556
        %v692 = vpop.f32.mrf.mxu0
        %v693 = vadd.f32 0.0, %v692
        %v694 = vpop.f32.mrf.mxu0
        %v695 = vpop.f32.mrf.mxu0
        %v696 = vadd.f32 0.0, %v695
        %v697 = vpop.f32.mrf.mxu0
        %698 = vmatprep.mubr.bf16.mxu0 0
        %699 = vmatmul.mubr.bf16.gmra.mxu0 %v559
        %v700 = vpop.f32.mrf.mxu0
        %v701 = vadd.f32 0.0, %v700
        %v702 = vpop.f32.mrf.mxu0
        %v703 = vpop.f32.mrf.mxu0
        %v704 = vadd.f32 0.0, %v703
        %v705 = vpop.f32.mrf.mxu0
        %706 = vmatprep.mubr.bf16.mxu0 0
        %707 = vmatmul.mubr.bf16.gmra.mxu0 %v562
        %v708 = vpop.f32.mrf.mxu0
        %v709 = vadd.f32 0.0, %v708
        %v710 = vpop.f32.mrf.mxu0
        %v711 = vpop.f32.mrf.mxu0
        %v712 = vadd.f32 0.0, %v711
        %v713 = vpop.f32.mrf.mxu0
        %714 = vmatprep.mubr.bf16.mxu0 0
        %715 = vmatmul.mubr.bf16.gmra.mxu0 %v565
        %v716 = vpop.f32.mrf.mxu0
        %v717 = vadd.f32 0.0, %v716
        %v718 = vpop.f32.mrf.mxu0
        %v719 = vpop.f32.mrf.mxu0
        %v720 = vadd.f32 0.0, %v719
        %v721 = vpop.f32.mrf.mxu0
        %722 = vmatprep.mubr.bf16.mxu0 0
        %723 = vmatmul.mubr.bf16.gmra.mxu0 %v568
        %v724 = vpop.f32.mrf.mxu0
        %v725 = vadd.f32 0.0, %v724
        %v726 = vpop.f32.mrf.mxu0
        %v727 = vpop.f32.mrf.mxu0
        %v728 = vadd.f32 0.0, %v727
        %v729 = vpop.f32.mrf.mxu0
        %730 = vdwg.mxu0
        %v735 = vunpack.c.l.b16 %v509
        %v736 = vunpack.c.l.b16 %v510
        %v737 = vunpack.c.l.b16 %v511
        %v738 = vunpack.c.l.b16 %v512
        %v739 = vpack.c.b16 %v736, %v735
        %v740 = vpack.c.b16 %v738, %v737
        %vm743 = vcmask 261120
        %v745 = vsel %vm743, %v445, 0
        %v748 = vsel %vm743, %v446, 0
        %v751 = vsel %vm743, %v447, 0
        %v754 = vsel %vm743, %v448, 0
        %v757 = vsel %vm743, %v449, 0
        %v760 = vsel %vm743, %v450, 0
        %v763 = vsel %vm743, %v451, 0
        %v766 = vsel %vm743, %v452, 0
        %v769 = vsel %vm743, %v453, 0
        %v772 = vsel %vm743, %v454, 0
        %v775 = vsel %vm743, %v455, 0
        %v778 = vsel %vm743, %v456, 0
        %v781 = vsel %vm743, %v457, 0
        %v784 = vsel %vm743, %v458, 0
        %v787 = vsel %vm743, %v459, 0
        %v790 = vsel %vm743, %v460, 0
        %792 = vmatprep.subr.bf16.mxu0 0
        %793 = vmatpush1.bf16.msra.mxu0 0
        %794 = vmatprep.subr.bf16.mxu0 0
        %795 = vmatpush1.bf16.msra.mxu0 0
        %796 = vmatprep.subr.bf16.mxu0 0
        %797 = vmatpush1.bf16.msra.mxu0 0
        %798 = vmatprep.subr.bf16.mxu0 0
        %799 = vmatpush1.bf16.msra.mxu0 0
        %800 = vmatprep.subr.bf16.mxu0 0
        %801 = vmatpush1.bf16.msra.mxu0 0
        %802 = vmatprep.subr.bf16.mxu0 0
        %803 = vmatpush1.bf16.msra.mxu0 0
        %804 = vmatprep.subr.bf16.mxu0 0
        %805 = vmatpush1.bf16.msra.mxu0 %v740
        %806 = vmatprep.subr.bf16.mxu0 0
        %807 = vmatpush1.bf16.msra.mxu0 %v739
        %808 = vmatprep.subr.bf16.mxu0 0
        %809 = vmatpush2.bf16.msra.mxu0 0
        %810 = vmatprep.subr.bf16.mxu0 0
        %811 = vmatpush2.bf16.msra.mxu0 0
        %812 = vmatprep.subr.bf16.mxu0 0
        %813 = vmatpush2.bf16.msra.mxu0 0
        %814 = vmatprep.subr.bf16.mxu0 0
        %815 = vmatpush2.bf16.msra.mxu0 0
        %816 = vmatprep.subr.bf16.mxu0 0
        %817 = vmatpush2.bf16.msra.mxu0 0
        %818 = vmatprep.subr.bf16.mxu0 0
        %819 = vmatpush2.bf16.msra.mxu0 0
        %820 = vmatprep.subr.bf16.mxu0 0
        %821 = vmatpush2.bf16.msra.mxu0 0
        %822 = vmatprep.subr.bf16.mxu0 0
        %823 = vmatpush2.bf16.msra.mxu0 0
        %824 = vmatprep.mubr.bf16.mxu0 0
        %825 = vmatmul.mubr.bf16.gmra.mxu0 %v745
        %v826 = vpop.f32.mrf.mxu0
        %v827 = vadd.f32 %v605, %v826
        %v828 = vpop.f32.mrf.mxu0
        %v829 = vpop.f32.mrf.mxu0
        %v830 = vadd.f32 %v608, %v829
        %v831 = vpop.f32.mrf.mxu0
        %832 = vmatprep.mubr.bf16.mxu0 0
        %833 = vmatmul.mubr.bf16.gmra.mxu0 %v748
        %v834 = vpop.f32.mrf.mxu0
        %v835 = vadd.f32 %v613, %v834
        %v836 = vpop.f32.mrf.mxu0
        %v837 = vpop.f32.mrf.mxu0
        %v838 = vadd.f32 %v616, %v837
        %v839 = vpop.f32.mrf.mxu0
        %840 = vmatprep.mubr.bf16.mxu0 0
        %841 = vmatmul.mubr.bf16.gmra.mxu0 %v751
        %v842 = vpop.f32.mrf.mxu0
        %v843 = vadd.f32 %v621, %v842
        %v844 = vpop.f32.mrf.mxu0
        %v845 = vpop.f32.mrf.mxu0
        %v846 = vadd.f32 %v624, %v845
        %v847 = vpop.f32.mrf.mxu0
        %848 = vmatprep.mubr.bf16.mxu0 0
        %849 = vmatmul.mubr.bf16.gmra.mxu0 %v754
        %v850 = vpop.f32.mrf.mxu0
        %v851 = vadd.f32 %v629, %v850
        %v852 = vpop.f32.mrf.mxu0
        %v853 = vpop.f32.mrf.mxu0
        %v854 = vadd.f32 %v632, %v853
        %v855 = vpop.f32.mrf.mxu0
        %856 = vmatprep.mubr.bf16.mxu0 0
        %857 = vmatmul.mubr.bf16.gmra.mxu0 %v757
        %v858 = vpop.f32.mrf.mxu0
        %v859 = vadd.f32 %v637, %v858
        %v860 = vpop.f32.mrf.mxu0
        %v861 = vpop.f32.mrf.mxu0
        %v862 = vadd.f32 %v640, %v861
        %v863 = vpop.f32.mrf.mxu0
        %864 = vmatprep.mubr.bf16.mxu0 0
        %865 = vmatmul.mubr.bf16.gmra.mxu0 %v760
        %v866 = vpop.f32.mrf.mxu0
        %v867 = vadd.f32 %v645, %v866
        %v868 = vpop.f32.mrf.mxu0
        %v869 = vpop.f32.mrf.mxu0
        %v870 = vadd.f32 %v648, %v869
        %v871 = vpop.f32.mrf.mxu0
        %872 = vmatprep.mubr.bf16.mxu0 0
        %873 = vmatmul.mubr.bf16.gmra.mxu0 %v763
        %v874 = vpop.f32.mrf.mxu0
        %v875 = vadd.f32 %v653, %v874
        %v876 = vpop.f32.mrf.mxu0
        %v877 = vpop.f32.mrf.mxu0
        %v878 = vadd.f32 %v656, %v877
        %v879 = vpop.f32.mrf.mxu0
        %880 = vmatprep.mubr.bf16.mxu0 0
        %881 = vmatmul.mubr.bf16.gmra.mxu0 %v766
        %v882 = vpop.f32.mrf.mxu0
        %v883 = vadd.f32 %v661, %v882
        %v884 = vpop.f32.mrf.mxu0
        %v885 = vpop.f32.mrf.mxu0
        %v886 = vadd.f32 %v664, %v885
        %v887 = vpop.f32.mrf.mxu0
        %888 = vmatprep.mubr.bf16.mxu0 0
        %889 = vmatmul.mubr.bf16.gmra.mxu0 %v769
        %v890 = vpop.f32.mrf.mxu0
        %v891 = vadd.f32 %v669, %v890
        %v892 = vpop.f32.mrf.mxu0
        %v893 = vpop.f32.mrf.mxu0
        %v894 = vadd.f32 %v672, %v893
        %v895 = vpop.f32.mrf.mxu0
        %896 = vmatprep.mubr.bf16.mxu0 0
        %897 = vmatmul.mubr.bf16.gmra.mxu0 %v772
        %v898 = vpop.f32.mrf.mxu0
        %v899 = vadd.f32 %v677, %v898
        %v900 = vpop.f32.mrf.mxu0
        %v901 = vpop.f32.mrf.mxu0
        %v902 = vadd.f32 %v680, %v901
        %v903 = vpop.f32.mrf.mxu0
        %904 = vmatprep.mubr.bf16.mxu0 0
        %905 = vmatmul.mubr.bf16.gmra.mxu0 %v775
        %v906 = vpop.f32.mrf.mxu0
        %v907 = vadd.f32 %v685, %v906
        %v908 = vpop.f32.mrf.mxu0
        %v909 = vpop.f32.mrf.mxu0
        %v910 = vadd.f32 %v688, %v909
        %v911 = vpop.f32.mrf.mxu0
        %912 = vmatprep.mubr.bf16.mxu0 0
        %913 = vmatmul.mubr.bf16.gmra.mxu0 %v778
        %v914 = vpop.f32.mrf.mxu0
        %v915 = vadd.f32 %v693, %v914
        %v916 = vpop.f32.mrf.mxu0
        %v917 = vpop.f32.mrf.mxu0
        %v918 = vadd.f32 %v696, %v917
        %v919 = vpop.f32.mrf.mxu0
        %920 = vmatprep.mubr.bf16.mxu0 0
        %921 = vmatmul.mubr.bf16.gmra.mxu0 %v781
        %v922 = vpop.f32.mrf.mxu0
        %v923 = vadd.f32 %v701, %v922
        %v924 = vpop.f32.mrf.mxu0
        %v925 = vpop.f32.mrf.mxu0
        %v926 = vadd.f32 %v704, %v925
        %v927 = vpop.f32.mrf.mxu0
        %928 = vmatprep.mubr.bf16.mxu0 0
        %929 = vmatmul.mubr.bf16.gmra.mxu0 %v784
        %v930 = vpop.f32.mrf.mxu0
        %v931 = vadd.f32 %v709, %v930
        %v932 = vpop.f32.mrf.mxu0
        %v933 = vpop.f32.mrf.mxu0
        %v934 = vadd.f32 %v712, %v933
        %v935 = vpop.f32.mrf.mxu0
        %936 = vmatprep.mubr.bf16.mxu0 0
        %937 = vmatmul.mubr.bf16.gmra.mxu0 %v787
        %v938 = vpop.f32.mrf.mxu0
        %v939 = vadd.f32 %v717, %v938
        %v940 = vpop.f32.mrf.mxu0
        %v941 = vpop.f32.mrf.mxu0
        %v942 = vadd.f32 %v720, %v941
        %v943 = vpop.f32.mrf.mxu0
        %944 = vmatprep.mubr.bf16.mxu0 0
        %945 = vmatmul.mubr.bf16.gmra.mxu0 %v790
        %v946 = vpop.f32.mrf.mxu0
        %v947 = vadd.f32 %v725, %v946
        %v948 = vpop.f32.mrf.mxu0
        %v949 = vpop.f32.mrf.mxu0
        %v950 = vadd.f32 %v728, %v949
        %v951 = vpop.f32.mrf.mxu0
        %952 = vdwg.mxu0
        %v953 = vld [vmem:[%s4] sm:$0x1]
        %v955 = vlaneseq
        %v956 = vshrl.u32 %v955, 7
        %v957 = vsub.s32 0, %v956
        %v958 = vrot.slane %v953, %v957
        %v960 = vadd.f32 %v827, %v958
        %v961 = vadd.f32 %v830, %v958
        %v962 = vadd.f32 %v835, %v958
        %v963 = vadd.f32 %v838, %v958
        %v964 = vadd.f32 %v843, %v958
        %v965 = vadd.f32 %v846, %v958
        %v966 = vadd.f32 %v851, %v958
        %v967 = vadd.f32 %v854, %v958
        %v968 = vadd.f32 %v859, %v958
        %v969 = vadd.f32 %v862, %v958
        %v970 = vadd.f32 %v867, %v958
        %v971 = vadd.f32 %v870, %v958
        %v972 = vadd.f32 %v875, %v958
        %v973 = vadd.f32 %v878, %v958
        %v974 = vadd.f32 %v883, %v958
        %v975 = vadd.f32 %v886, %v958
        %v976 = vadd.f32 %v891, %v958
        %v977 = vadd.f32 %v894, %v958
        %v978 = vadd.f32 %v899, %v958
        %v979 = vadd.f32 %v902, %v958
        %v980 = vadd.f32 %v907, %v958
        %v981 = vadd.f32 %v910, %v958
        %v982 = vadd.f32 %v915, %v958
        %v983 = vadd.f32 %v918, %v958
        %v984 = vadd.f32 %v923, %v958
        %v985 = vadd.f32 %v926, %v958
        %v986 = vadd.f32 %v931, %v958
        %v987 = vadd.f32 %v934, %v958
        %v988 = vadd.f32 %v939, %v958
        %v989 = vadd.f32 %v942, %v958
        %v990 = vadd.f32 %v947, %v958
        %v991 = vadd.f32 %v950, %v958
        %v992 = vmax.f32 %v960, 0.0
        %v993 = vmax.f32 %v961, 0.0
        %v994 = vmax.f32 %v962, 0.0
        %v995 = vmax.f32 %v963, 0.0
        %v996 = vmax.f32 %v964, 0.0
        %v997 = vmax.f32 %v965, 0.0
        %v998 = vmax.f32 %v966, 0.0
        %v999 = vmax.f32 %v967, 0.0
        %v1000 = vmax.f32 %v968, 0.0
        %v1001 = vmax.f32 %v969, 0.0
        %v1002 = vmax.f32 %v970, 0.0
        %v1003 = vmax.f32 %v971, 0.0
        %v1004 = vmax.f32 %v972, 0.0
        %v1005 = vmax.f32 %v973, 0.0
        %v1006 = vmax.f32 %v974, 0.0
        %v1007 = vmax.f32 %v975, 0.0
        %v1008 = vmax.f32 %v976, 0.0
        %v1009 = vmax.f32 %v977, 0.0
        %v1010 = vmax.f32 %v978, 0.0
        %v1011 = vmax.f32 %v979, 0.0
        %v1012 = vmax.f32 %v980, 0.0
        %v1013 = vmax.f32 %v981, 0.0
        %v1014 = vmax.f32 %v982, 0.0
        %v1015 = vmax.f32 %v983, 0.0
        %v1016 = vmax.f32 %v984, 0.0
        %v1017 = vmax.f32 %v985, 0.0
        %v1018 = vmax.f32 %v986, 0.0
        %v1019 = vmax.f32 %v987, 0.0
        %v1020 = vmax.f32 %v988, 0.0
        %v1021 = vmax.f32 %v989, 0.0
        %v1022 = vmax.f32 %v990, 0.0
        %v1023 = vmax.f32 %v991, 0.0
        %v1024 = vpack.c.bf16 %v993, %v992
        %v1025 = vpack.c.bf16 %v995, %v994
        %v1026 = vpack.c.bf16 %v997, %v996
        %v1027 = vpack.c.bf16 %v999, %v998
        %v1028 = vpack.c.bf16 %v1001, %v1000
        %v1029 = vpack.c.bf16 %v1003, %v1002
        %v1030 = vpack.c.bf16 %v1005, %v1004
        %v1031 = vpack.c.bf16 %v1007, %v1006
        %v1032 = vpack.c.bf16 %v1009, %v1008
        %v1033 = vpack.c.bf16 %v1011, %v1010
        %v1034 = vpack.c.bf16 %v1013, %v1012
        %v1035 = vpack.c.bf16 %v1015, %v1014
        %v1036 = vpack.c.bf16 %v1017, %v1016
        %v1037 = vpack.c.bf16 %v1019, %v1018
        %v1038 = vpack.c.bf16 %v1021, %v1020
        %v1039 = vpack.c.bf16 %v1023, %v1022
        %v1040 = vld [vmem:[%s5] sm:$0xf]
        %v1041 = vld [vmem:[%s5 + $0x4] sm:$0xf]
        %v1042 = vld [vmem:[%s5 + $0x8] sm:$0xf]
        %v1043 = vld [vmem:[%s5 + $0xc] sm:$0xf]
        %v1044 = vld [vmem:[%s5 + $0x10] sm:$0xf]
        %v1045 = vld [vmem:[%s5 + $0x14] sm:$0xf]
        %v1046 = vld [vmem:[%s5 + $0x18] sm:$0xf]
        %v1047 = vld [vmem:[%s5 + $0x1c] sm:$0xf]
        %v1048 = vld [vmem:[%s6] sm:$0x1]
        %v1050 = vlaneseq
        %v1051 = vshrl.u32 %v1050, 7
        %v1052 = vsub.s32 0, %v1051
        %v1053 = vrot.slane %v1048, %v1052
        %v1063 = vunpack.c.l.b16 %v1040
        %v1064 = vunpack.c.l.b16 %v1041
        %v1065 = vunpack.c.l.b16 %v1042
        %v1066 = vunpack.c.l.b16 %v1043
        %v1067 = vunpack.c.l.b16 %v1044
        %v1068 = vunpack.c.l.b16 %v1045
        %v1069 = vunpack.c.l.b16 %v1046
        %v1070 = vunpack.c.l.b16 %v1047
        %v1071 = vpack.c.b16 %v1064, %v1063
        %v1072 = vpack.c.b16 %v1066, %v1065
        %v1073 = vpack.c.b16 %v1068, %v1067
        %v1074 = vpack.c.b16 %v1070, %v1069
        %vm1079 = vcmask 523264
        %v1081 = vsel %vm1079, %v1024, 0
        %v1084 = vsel %vm1079, %v1025, 0
        %v1087 = vsel %vm1079, %v1026, 0
        %v1090 = vsel %vm1079, %v1027, 0
        %v1093 = vsel %vm1079, %v1028, 0
        %v1096 = vsel %vm1079, %v1029, 0
        %v1099 = vsel %vm1079, %v1030, 0
        %v1102 = vsel %vm1079, %v1031, 0
        %v1105 = vsel %vm1079, %v1032, 0
        %v1108 = vsel %vm1079, %v1033, 0
        %v1111 = vsel %vm1079, %v1034, 0
        %v1114 = vsel %vm1079, %v1035, 0
        %v1117 = vsel %vm1079, %v1036, 0
        %v1120 = vsel %vm1079, %v1037, 0
        %v1123 = vsel %vm1079, %v1038, 0
        %v1126 = vsel %vm1079, %v1039, 0
        %1128 = vmatprep.subr.bf16.mxu0 0
        %1129 = vmatpush1.bf16.msra.mxu0 0
        %1130 = vmatprep.subr.bf16.mxu0 0
        %1131 = vmatpush1.bf16.msra.mxu0 0
        %1132 = vmatprep.subr.bf16.mxu0 0
        %1133 = vmatpush1.bf16.msra.mxu0 0
        %1134 = vmatprep.subr.bf16.mxu0 0
        %1135 = vmatpush1.bf16.msra.mxu0 0
        %1136 = vmatprep.subr.bf16.mxu0 0
        %1137 = vmatpush1.bf16.msra.mxu0 %v1074
        %1138 = vmatprep.subr.bf16.mxu0 0
        %1139 = vmatpush1.bf16.msra.mxu0 %v1073
        %1140 = vmatprep.subr.bf16.mxu0 0
        %1141 = vmatpush1.bf16.msra.mxu0 %v1072
        %1142 = vmatprep.subr.bf16.mxu0 0
        %1143 = vmatpush1.bf16.msra.mxu0 %v1071
        %1144 = vmatprep.subr.bf16.mxu0 0
        %1145 = vmatpush2.bf16.msra.mxu0 0
        %1146 = vmatprep.subr.bf16.mxu0 0
        %1147 = vmatpush2.bf16.msra.mxu0 0
        %1148 = vmatprep.subr.bf16.mxu0 0
        %1149 = vmatpush2.bf16.msra.mxu0 0
        %1150 = vmatprep.subr.bf16.mxu0 0
        %1151 = vmatpush2.bf16.msra.mxu0 0
        %1152 = vmatprep.subr.bf16.mxu0 0
        %1153 = vmatpush2.bf16.msra.mxu0 0
        %1154 = vmatprep.subr.bf16.mxu0 0
        %1155 = vmatpush2.bf16.msra.mxu0 0
        %1156 = vmatprep.subr.bf16.mxu0 0
        %1157 = vmatpush2.bf16.msra.mxu0 0
        %1158 = vmatprep.subr.bf16.mxu0 0
        %1159 = vmatpush2.bf16.msra.mxu0 0
        %1160 = vmatprep.mubr.bf16.mxu0 0
        %1161 = vmatmul.mubr.bf16.gmra.mxu0 %v1081
        %v1162 = vpop.f32.mrf.mxu0
        %v1163 = vadd.f32 %v1053, %v1162
        %v1164 = vpop.f32.mrf.mxu0
        %v1165 = vpop.f32.mrf.mxu0
        %v1166 = vadd.f32 %v1053, %v1165
        %v1167 = vpop.f32.mrf.mxu0
        %1168 = vmatprep.mubr.bf16.mxu0 0
        %1169 = vmatmul.mubr.bf16.gmra.mxu0 %v1084
        %v1170 = vpop.f32.mrf.mxu0
        %v1171 = vadd.f32 %v1053, %v1170
        %v1172 = vpop.f32.mrf.mxu0
        %v1173 = vpop.f32.mrf.mxu0
        %v1174 = vadd.f32 %v1053, %v1173
        %v1175 = vpop.f32.mrf.mxu0
        %1176 = vmatprep.mubr.bf16.mxu0 0
        %1177 = vmatmul.mubr.bf16.gmra.mxu0 %v1087
        %v1178 = vpop.f32.mrf.mxu0
        %v1179 = vadd.f32 %v1053, %v1178
        %v1180 = vpop.f32.mrf.mxu0
        %v1181 = vpop.f32.mrf.mxu0
        %v1182 = vadd.f32 %v1053, %v1181
        %v1183 = vpop.f32.mrf.mxu0
        %1184 = vmatprep.mubr.bf16.mxu0 0
        %1185 = vmatmul.mubr.bf16.gmra.mxu0 %v1090
        %v1186 = vpop.f32.mrf.mxu0
        %v1187 = vadd.f32 %v1053, %v1186
        %v1188 = vpop.f32.mrf.mxu0
        %v1189 = vpop.f32.mrf.mxu0
        %v1190 = vadd.f32 %v1053, %v1189
        %v1191 = vpop.f32.mrf.mxu0
        %1192 = vmatprep.mubr.bf16.mxu0 0
        %1193 = vmatmul.mubr.bf16.gmra.mxu0 %v1093
        %v1194 = vpop.f32.mrf.mxu0
        %v1195 = vadd.f32 %v1053, %v1194
        %v1196 = vpop.f32.mrf.mxu0
        %v1197 = vpop.f32.mrf.mxu0
        %v1198 = vadd.f32 %v1053, %v1197
        %v1199 = vpop.f32.mrf.mxu0
        %1200 = vmatprep.mubr.bf16.mxu0 0
        %1201 = vmatmul.mubr.bf16.gmra.mxu0 %v1096
        %v1202 = vpop.f32.mrf.mxu0
        %v1203 = vadd.f32 %v1053, %v1202
        %v1204 = vpop.f32.mrf.mxu0
        %v1205 = vpop.f32.mrf.mxu0
        %v1206 = vadd.f32 %v1053, %v1205
        %v1207 = vpop.f32.mrf.mxu0
        %1208 = vmatprep.mubr.bf16.mxu0 0
        %1209 = vmatmul.mubr.bf16.gmra.mxu0 %v1099
        %v1210 = vpop.f32.mrf.mxu0
        %v1211 = vadd.f32 %v1053, %v1210
        %v1212 = vpop.f32.mrf.mxu0
        %v1213 = vpop.f32.mrf.mxu0
        %v1214 = vadd.f32 %v1053, %v1213
        %v1215 = vpop.f32.mrf.mxu0
        %1216 = vmatprep.mubr.bf16.mxu0 0
        %1217 = vmatmul.mubr.bf16.gmra.mxu0 %v1102
        %v1218 = vpop.f32.mrf.mxu0
        %v1219 = vadd.f32 %v1053, %v1218
        %v1220 = vpop.f32.mrf.mxu0
        %v1221 = vpop.f32.mrf.mxu0
        %v1222 = vadd.f32 %v1053, %v1221
        %v1223 = vpop.f32.mrf.mxu0
        %1224 = vmatprep.mubr.bf16.mxu0 0
        %1225 = vmatmul.mubr.bf16.gmra.mxu0 %v1105
        %v1226 = vpop.f32.mrf.mxu0
        %v1227 = vadd.f32 %v1053, %v1226
        %v1228 = vpop.f32.mrf.mxu0
        %v1229 = vpop.f32.mrf.mxu0
        %v1230 = vadd.f32 %v1053, %v1229
        %v1231 = vpop.f32.mrf.mxu0
        %1232 = vmatprep.mubr.bf16.mxu0 0
        %1233 = vmatmul.mubr.bf16.gmra.mxu0 %v1108
        %v1234 = vpop.f32.mrf.mxu0
        %v1235 = vadd.f32 %v1053, %v1234
        %v1236 = vpop.f32.mrf.mxu0
        %v1237 = vpop.f32.mrf.mxu0
        %v1238 = vadd.f32 %v1053, %v1237
        %v1239 = vpop.f32.mrf.mxu0
        %1240 = vmatprep.mubr.bf16.mxu0 0
        %1241 = vmatmul.mubr.bf16.gmra.mxu0 %v1111
        %v1242 = vpop.f32.mrf.mxu0
        %v1243 = vadd.f32 %v1053, %v1242
        %v1244 = vpop.f32.mrf.mxu0
        %v1245 = vpop.f32.mrf.mxu0
        %v1246 = vadd.f32 %v1053, %v1245
        %v1247 = vpop.f32.mrf.mxu0
        %1248 = vmatprep.mubr.bf16.mxu0 0
        %1249 = vmatmul.mubr.bf16.gmra.mxu0 %v1114
        %v1250 = vpop.f32.mrf.mxu0
        %v1251 = vadd.f32 %v1053, %v1250
        %v1252 = vpop.f32.mrf.mxu0
        %v1253 = vpop.f32.mrf.mxu0
        %v1254 = vadd.f32 %v1053, %v1253
        %v1255 = vpop.f32.mrf.mxu0
        %1256 = vmatprep.mubr.bf16.mxu0 0
        %1257 = vmatmul.mubr.bf16.gmra.mxu0 %v1117
        %v1258 = vpop.f32.mrf.mxu0
        %v1259 = vadd.f32 %v1053, %v1258
        %v1260 = vpop.f32.mrf.mxu0
        %v1261 = vpop.f32.mrf.mxu0
        %v1262 = vadd.f32 %v1053, %v1261
        %v1263 = vpop.f32.mrf.mxu0
        %1264 = vmatprep.mubr.bf16.mxu0 0
        %1265 = vmatmul.mubr.bf16.gmra.mxu0 %v1120
        %v1266 = vpop.f32.mrf.mxu0
        %v1267 = vadd.f32 %v1053, %v1266
        %v1268 = vpop.f32.mrf.mxu0
        %v1269 = vpop.f32.mrf.mxu0
        %v1270 = vadd.f32 %v1053, %v1269
        %v1271 = vpop.f32.mrf.mxu0
        %1272 = vmatprep.mubr.bf16.mxu0 0
        %1273 = vmatmul.mubr.bf16.gmra.mxu0 %v1123
        %v1274 = vpop.f32.mrf.mxu0
        %v1275 = vadd.f32 %v1053, %v1274
        %v1276 = vpop.f32.mrf.mxu0
        %v1277 = vpop.f32.mrf.mxu0
        %v1278 = vadd.f32 %v1053, %v1277
        %v1279 = vpop.f32.mrf.mxu0
        %1280 = vmatprep.mubr.bf16.mxu0 0
        %1281 = vmatmul.mubr.bf16.gmra.mxu0 %v1126
        %v1282 = vpop.f32.mrf.mxu0
        %v1283 = vadd.f32 %v1053, %v1282
        %v1284 = vpop.f32.mrf.mxu0
        %v1285 = vpop.f32.mrf.mxu0
        %v1286 = vadd.f32 %v1053, %v1285
        %v1287 = vpop.f32.mrf.mxu0
        %1288 = vdwg.mxu0
        %v1289 = vmax.f32 %v1163, 0.0
        %v1290 = vmax.f32 %v1166, 0.0
        %v1291 = vmax.f32 %v1171, 0.0
        %v1292 = vmax.f32 %v1174, 0.0
        %v1293 = vmax.f32 %v1179, 0.0
        %v1294 = vmax.f32 %v1182, 0.0
        %v1295 = vmax.f32 %v1187, 0.0
        %v1296 = vmax.f32 %v1190, 0.0
        %v1297 = vmax.f32 %v1195, 0.0
        %v1298 = vmax.f32 %v1198, 0.0
        %v1299 = vmax.f32 %v1203, 0.0
        %v1300 = vmax.f32 %v1206, 0.0
        %v1301 = vmax.f32 %v1211, 0.0
        %v1302 = vmax.f32 %v1214, 0.0
        %v1303 = vmax.f32 %v1219, 0.0
        %v1304 = vmax.f32 %v1222, 0.0
        %v1305 = vmax.f32 %v1227, 0.0
        %v1306 = vmax.f32 %v1230, 0.0
        %v1307 = vmax.f32 %v1235, 0.0
        %v1308 = vmax.f32 %v1238, 0.0
        %v1309 = vmax.f32 %v1243, 0.0
        %v1310 = vmax.f32 %v1246, 0.0
        %v1311 = vmax.f32 %v1251, 0.0
        %v1312 = vmax.f32 %v1254, 0.0
        %v1313 = vmax.f32 %v1259, 0.0
        %v1314 = vmax.f32 %v1262, 0.0
        %v1315 = vmax.f32 %v1267, 0.0
        %v1316 = vmax.f32 %v1270, 0.0
        %v1317 = vmax.f32 %v1275, 0.0
        %v1318 = vmax.f32 %v1278, 0.0
        %v1319 = vmax.f32 %v1283, 0.0
        %v1320 = vmax.f32 %v1286, 0.0
        %v1321 = vpack.c.bf16 %v1290, %v1289
        %v1322 = vpack.c.bf16 %v1292, %v1291
        %v1323 = vpack.c.bf16 %v1294, %v1293
        %v1324 = vpack.c.bf16 %v1296, %v1295
        %v1325 = vpack.c.bf16 %v1298, %v1297
        %v1326 = vpack.c.bf16 %v1300, %v1299
        %v1327 = vpack.c.bf16 %v1302, %v1301
        %v1328 = vpack.c.bf16 %v1304, %v1303
        %v1329 = vpack.c.bf16 %v1306, %v1305
        %v1330 = vpack.c.bf16 %v1308, %v1307
        %v1331 = vpack.c.bf16 %v1310, %v1309
        %v1332 = vpack.c.bf16 %v1312, %v1311
        %v1333 = vpack.c.bf16 %v1314, %v1313
        %v1334 = vpack.c.bf16 %v1316, %v1315
        %v1335 = vpack.c.bf16 %v1318, %v1317
        %v1336 = vpack.c.bf16 %v1320, %v1319
        %v1337 = vld [vmem:[%s7] sm:$0xf]
        %v1338 = vld [vmem:[%s7 + $0x4] sm:$0xf]
        %v1339 = vld [vmem:[%s7 + $0x8] sm:$0xf]
        %v1340 = vld [vmem:[%s7 + $0xc] sm:$0xf]
        %v1341 = vld [vmem:[%s7 + $0x10] sm:$0xf]
        %v1342 = vld [vmem:[%s7 + $0x14] sm:$0xf]
        %v1343 = vld [vmem:[%s7 + $0x18] sm:$0xf]
        %v1344 = vld [vmem:[%s7 + $0x1c] sm:$0xf]
        %v1345 = vld [vmem:[%s8] sm:$0x1]
        %v1347 = vlaneseq
        %v1348 = vshrl.u32 %v1347, 7
        %v1349 = vsub.s32 0, %v1348
        %v1350 = vrot.slane %v1345, %v1349
        %v1360 = vunpack.c.l.b16 %v1337
        %v1361 = vunpack.c.l.b16 %v1338
        %v1362 = vunpack.c.l.b16 %v1339
        %v1363 = vunpack.c.l.b16 %v1340
        %v1364 = vunpack.c.l.b16 %v1341
        %v1365 = vunpack.c.l.b16 %v1342
        %v1366 = vunpack.c.l.b16 %v1343
        %v1367 = vunpack.c.l.b16 %v1344
        %v1368 = vpack.c.b16 %v1361, %v1360
        %v1369 = vpack.c.b16 %v1363, %v1362
        %v1370 = vpack.c.b16 %v1365, %v1364
        %v1371 = vpack.c.b16 %v1367, %v1366
        %v1377 = vsel %vm1079, %v1321, 0
        %v1380 = vsel %vm1079, %v1322, 0
        %v1383 = vsel %vm1079, %v1323, 0
        %v1386 = vsel %vm1079, %v1324, 0
        %v1389 = vsel %vm1079, %v1325, 0
        %v1392 = vsel %vm1079, %v1326, 0
        %v1395 = vsel %vm1079, %v1327, 0
        %v1398 = vsel %vm1079, %v1328, 0
        %v1401 = vsel %vm1079, %v1329, 0
        %v1404 = vsel %vm1079, %v1330, 0
        %v1407 = vsel %vm1079, %v1331, 0
        %v1410 = vsel %vm1079, %v1332, 0
        %v1413 = vsel %vm1079, %v1333, 0
        %v1416 = vsel %vm1079, %v1334, 0
        %v1419 = vsel %vm1079, %v1335, 0
        %v1422 = vsel %vm1079, %v1336, 0
        %1424 = vmatprep.subr.bf16.mxu0 0
        %1425 = vmatpush1.bf16.msra.mxu0 0
        %1426 = vmatprep.subr.bf16.mxu0 0
        %1427 = vmatpush1.bf16.msra.mxu0 0
        %1428 = vmatprep.subr.bf16.mxu0 0
        %1429 = vmatpush1.bf16.msra.mxu0 0
        %1430 = vmatprep.subr.bf16.mxu0 0
        %1431 = vmatpush1.bf16.msra.mxu0 0
        %1432 = vmatprep.subr.bf16.mxu0 0
        %1433 = vmatpush1.bf16.msra.mxu0 %v1371
        %1434 = vmatprep.subr.bf16.mxu0 0
        %1435 = vmatpush1.bf16.msra.mxu0 %v1370
        %1436 = vmatprep.subr.bf16.mxu0 0
        %1437 = vmatpush1.bf16.msra.mxu0 %v1369
        %1438 = vmatprep.subr.bf16.mxu0 0
        %1439 = vmatpush1.bf16.msra.mxu0 %v1368
        %1440 = vmatprep.subr.bf16.mxu0 0
        %1441 = vmatpush2.bf16.msra.mxu0 0
        %1442 = vmatprep.subr.bf16.mxu0 0
        %1443 = vmatpush2.bf16.msra.mxu0 0
        %1444 = vmatprep.subr.bf16.mxu0 0
        %1445 = vmatpush2.bf16.msra.mxu0 0
        %1446 = vmatprep.subr.bf16.mxu0 0
        %1447 = vmatpush2.bf16.msra.mxu0 0
        %1448 = vmatprep.subr.bf16.mxu0 0
        %1449 = vmatpush2.bf16.msra.mxu0 0
        %1450 = vmatprep.subr.bf16.mxu0 0
        %1451 = vmatpush2.bf16.msra.mxu0 0
        %1452 = vmatprep.subr.bf16.mxu0 0
        %1453 = vmatpush2.bf16.msra.mxu0 0
        %1454 = vmatprep.subr.bf16.mxu0 0
        %1455 = vmatpush2.bf16.msra.mxu0 0
        %1456 = vmatprep.mubr.bf16.mxu0 0
        %1457 = vmatmul.mubr.bf16.gmra.mxu0 %v1377
        %v1458 = vpop.f32.mrf.mxu0
        %v1459 = vadd.f32 %v1350, %v1458
        %v1460 = vpop.f32.mrf.mxu0
        %v1461 = vpop.f32.mrf.mxu0
        %v1462 = vadd.f32 %v1350, %v1461
        %v1463 = vpop.f32.mrf.mxu0
        %1464 = vmatprep.mubr.bf16.mxu0 0
        %1465 = vmatmul.mubr.bf16.gmra.mxu0 %v1380
        %v1466 = vpop.f32.mrf.mxu0
        %v1467 = vadd.f32 %v1350, %v1466
        %v1468 = vpop.f32.mrf.mxu0
        %v1469 = vpop.f32.mrf.mxu0
        %v1470 = vadd.f32 %v1350, %v1469
        %v1471 = vpop.f32.mrf.mxu0
        %1472 = vmatprep.mubr.bf16.mxu0 0
        %1473 = vmatmul.mubr.bf16.gmra.mxu0 %v1383
        %v1474 = vpop.f32.mrf.mxu0
        %v1475 = vadd.f32 %v1350, %v1474
        %v1476 = vpop.f32.mrf.mxu0
        %v1477 = vpop.f32.mrf.mxu0
        %v1478 = vadd.f32 %v1350, %v1477
        %v1479 = vpop.f32.mrf.mxu0
        %1480 = vmatprep.mubr.bf16.mxu0 0
        %1481 = vmatmul.mubr.bf16.gmra.mxu0 %v1386
        %v1482 = vpop.f32.mrf.mxu0
        %v1483 = vadd.f32 %v1350, %v1482
        %v1484 = vpop.f32.mrf.mxu0
        %v1485 = vpop.f32.mrf.mxu0
        %v1486 = vadd.f32 %v1350, %v1485
        %v1487 = vpop.f32.mrf.mxu0
        %1488 = vmatprep.mubr.bf16.mxu0 0
        %1489 = vmatmul.mubr.bf16.gmra.mxu0 %v1389
        %v1490 = vpop.f32.mrf.mxu0
        %v1491 = vadd.f32 %v1350, %v1490
        %v1492 = vpop.f32.mrf.mxu0
        %v1493 = vpop.f32.mrf.mxu0
        %v1494 = vadd.f32 %v1350, %v1493
        %v1495 = vpop.f32.mrf.mxu0
        %1496 = vmatprep.mubr.bf16.mxu0 0
        %1497 = vmatmul.mubr.bf16.gmra.mxu0 %v1392
        %v1498 = vpop.f32.mrf.mxu0
        %v1499 = vadd.f32 %v1350, %v1498
        %v1500 = vpop.f32.mrf.mxu0
        %v1501 = vpop.f32.mrf.mxu0
        %v1502 = vadd.f32 %v1350, %v1501
        %v1503 = vpop.f32.mrf.mxu0
        %1504 = vmatprep.mubr.bf16.mxu0 0
        %1505 = vmatmul.mubr.bf16.gmra.mxu0 %v1395
        %v1506 = vpop.f32.mrf.mxu0
        %v1507 = vadd.f32 %v1350, %v1506
        %v1508 = vpop.f32.mrf.mxu0
        %v1509 = vpop.f32.mrf.mxu0
        %v1510 = vadd.f32 %v1350, %v1509
        %v1511 = vpop.f32.mrf.mxu0
        %1512 = vmatprep.mubr.bf16.mxu0 0
        %1513 = vmatmul.mubr.bf16.gmra.mxu0 %v1398
        %v1514 = vpop.f32.mrf.mxu0
        %v1515 = vadd.f32 %v1350, %v1514
        %v1516 = vpop.f32.mrf.mxu0
        %v1517 = vpop.f32.mrf.mxu0
        %v1518 = vadd.f32 %v1350, %v1517
        %v1519 = vpop.f32.mrf.mxu0
        %1520 = vmatprep.mubr.bf16.mxu0 0
        %1521 = vmatmul.mubr.bf16.gmra.mxu0 %v1401
        %v1522 = vpop.f32.mrf.mxu0
        %v1523 = vadd.f32 %v1350, %v1522
        %v1524 = vpop.f32.mrf.mxu0
        %v1525 = vpop.f32.mrf.mxu0
        %v1526 = vadd.f32 %v1350, %v1525
        %v1527 = vpop.f32.mrf.mxu0
        %1528 = vmatprep.mubr.bf16.mxu0 0
        %1529 = vmatmul.mubr.bf16.gmra.mxu0 %v1404
        %v1530 = vpop.f32.mrf.mxu0
        %v1531 = vadd.f32 %v1350, %v1530
        %v1532 = vpop.f32.mrf.mxu0
        %v1533 = vpop.f32.mrf.mxu0
        %v1534 = vadd.f32 %v1350, %v1533
        %v1535 = vpop.f32.mrf.mxu0
        %1536 = vmatprep.mubr.bf16.mxu0 0
        %1537 = vmatmul.mubr.bf16.gmra.mxu0 %v1407
        %v1538 = vpop.f32.mrf.mxu0
        %v1539 = vadd.f32 %v1350, %v1538
        %v1540 = vpop.f32.mrf.mxu0
        %v1541 = vpop.f32.mrf.mxu0
        %v1542 = vadd.f32 %v1350, %v1541
        %v1543 = vpop.f32.mrf.mxu0
        %1544 = vmatprep.mubr.bf16.mxu0 0
        %1545 = vmatmul.mubr.bf16.gmra.mxu0 %v1410
        %v1546 = vpop.f32.mrf.mxu0
        %v1547 = vadd.f32 %v1350, %v1546
        %v1548 = vpop.f32.mrf.mxu0
        %v1549 = vpop.f32.mrf.mxu0
        %v1550 = vadd.f32 %v1350, %v1549
        %v1551 = vpop.f32.mrf.mxu0
        %1552 = vmatprep.mubr.bf16.mxu0 0
        %1553 = vmatmul.mubr.bf16.gmra.mxu0 %v1413
        %v1554 = vpop.f32.mrf.mxu0
        %v1555 = vadd.f32 %v1350, %v1554
        %v1556 = vpop.f32.mrf.mxu0
        %v1557 = vpop.f32.mrf.mxu0
        %v1558 = vadd.f32 %v1350, %v1557
        %v1559 = vpop.f32.mrf.mxu0
        %1560 = vmatprep.mubr.bf16.mxu0 0
        %1561 = vmatmul.mubr.bf16.gmra.mxu0 %v1416
        %v1562 = vpop.f32.mrf.mxu0
        %v1563 = vadd.f32 %v1350, %v1562
        %v1564 = vpop.f32.mrf.mxu0
        %v1565 = vpop.f32.mrf.mxu0
        %v1566 = vadd.f32 %v1350, %v1565
        %v1567 = vpop.f32.mrf.mxu0
        %1568 = vmatprep.mubr.bf16.mxu0 0
        %1569 = vmatmul.mubr.bf16.gmra.mxu0 %v1419
        %v1570 = vpop.f32.mrf.mxu0
        %v1571 = vadd.f32 %v1350, %v1570
        %v1572 = vpop.f32.mrf.mxu0
        %v1573 = vpop.f32.mrf.mxu0
        %v1574 = vadd.f32 %v1350, %v1573
        %v1575 = vpop.f32.mrf.mxu0
        %1576 = vmatprep.mubr.bf16.mxu0 0
        %1577 = vmatmul.mubr.bf16.gmra.mxu0 %v1422
        %v1578 = vpop.f32.mrf.mxu0
        %v1579 = vadd.f32 %v1350, %v1578
        %v1580 = vpop.f32.mrf.mxu0
        %v1581 = vpop.f32.mrf.mxu0
        %v1582 = vadd.f32 %v1350, %v1581
        %v1583 = vpop.f32.mrf.mxu0
        %1584 = vdwg.mxu0
        %v1585 = vmax.f32 %v1459, 0.0
        %v1586 = vmax.f32 %v1462, 0.0
        %v1587 = vmax.f32 %v1467, 0.0
        %v1588 = vmax.f32 %v1470, 0.0
        %v1589 = vmax.f32 %v1475, 0.0
        %v1590 = vmax.f32 %v1478, 0.0
        %v1591 = vmax.f32 %v1483, 0.0
        %v1592 = vmax.f32 %v1486, 0.0
        %v1593 = vmax.f32 %v1491, 0.0
        %v1594 = vmax.f32 %v1494, 0.0
        %v1595 = vmax.f32 %v1499, 0.0
        %v1596 = vmax.f32 %v1502, 0.0
        %v1597 = vmax.f32 %v1507, 0.0
        %v1598 = vmax.f32 %v1510, 0.0
        %v1599 = vmax.f32 %v1515, 0.0
        %v1600 = vmax.f32 %v1518, 0.0
        %v1601 = vmax.f32 %v1523, 0.0
        %v1602 = vmax.f32 %v1526, 0.0
        %v1603 = vmax.f32 %v1531, 0.0
        %v1604 = vmax.f32 %v1534, 0.0
        %v1605 = vmax.f32 %v1539, 0.0
        %v1606 = vmax.f32 %v1542, 0.0
        %v1607 = vmax.f32 %v1547, 0.0
        %v1608 = vmax.f32 %v1550, 0.0
        %v1609 = vmax.f32 %v1555, 0.0
        %v1610 = vmax.f32 %v1558, 0.0
        %v1611 = vmax.f32 %v1563, 0.0
        %v1612 = vmax.f32 %v1566, 0.0
        %v1613 = vmax.f32 %v1571, 0.0
        %v1614 = vmax.f32 %v1574, 0.0
        %v1615 = vmax.f32 %v1579, 0.0
        %v1616 = vmax.f32 %v1582, 0.0
        %v1617 = vpack.c.bf16 %v1586, %v1585
        %v1618 = vpack.c.bf16 %v1588, %v1587
        %v1619 = vpack.c.bf16 %v1590, %v1589
        %v1620 = vpack.c.bf16 %v1592, %v1591
        %v1621 = vpack.c.bf16 %v1594, %v1593
        %v1622 = vpack.c.bf16 %v1596, %v1595
        %v1623 = vpack.c.bf16 %v1598, %v1597
        %v1624 = vpack.c.bf16 %v1600, %v1599
        %v1625 = vpack.c.bf16 %v1602, %v1601
        %v1626 = vpack.c.bf16 %v1604, %v1603
        %v1627 = vpack.c.bf16 %v1606, %v1605
        %v1628 = vpack.c.bf16 %v1608, %v1607
        %v1629 = vpack.c.bf16 %v1610, %v1609
        %v1630 = vpack.c.bf16 %v1612, %v1611
        %v1631 = vpack.c.bf16 %v1614, %v1613
        %v1632 = vpack.c.bf16 %v1616, %v1615
        %v1633 = vld [vmem:[%s9] sm:$0x1]
        %v1634 = vld [vmem:[#allocation2] sm:$0x1]
        %1636 = vset.pattern.permute.xlu0 0
        %1637 = vperm.xlu0 %1636, %v1634
        %v1638 = vpop.permute.xlu0 %1637
        %v1640 = vlaneseq
        %v1641 = vshrl.u32 %v1640, 7
        %v1642 = vsub.s32 0, %v1641
        %v1643 = vrot.slane %v1638, %v1642
        %v1645 = vsel %vm1079, %v1633, 0
        %v1648 = vsel %vm1079, %v1617, 0
        %v1651 = vsel %vm1079, %v1618, 0
        %v1654 = vsel %vm1079, %v1619, 0
        %v1657 = vsel %vm1079, %v1620, 0
        %v1660 = vsel %vm1079, %v1621, 0
        %v1663 = vsel %vm1079, %v1622, 0
        %v1666 = vsel %vm1079, %v1623, 0
        %v1669 = vsel %vm1079, %v1624, 0
        %v1672 = vsel %vm1079, %v1625, 0
        %v1675 = vsel %vm1079, %v1626, 0
        %v1678 = vsel %vm1079, %v1627, 0
        %v1681 = vsel %vm1079, %v1628, 0
        %v1684 = vsel %vm1079, %v1629, 0
        %v1687 = vsel %vm1079, %v1630, 0
        %v1690 = vsel %vm1079, %v1631, 0
        %v1693 = vsel %vm1079, %v1632, 0
        %1695 = vmatprep.subr.bf16.mxu0 0
        %1696 = vmatpush1.bf16.xpose.msra.mxu0 %v1669
        %1697 = vmatprep.subr.bf16.mxu0 0
        %1698 = vmatpush1.bf16.xpose.msra.mxu0 %v1666
        %1699 = vmatprep.subr.bf16.mxu0 0
        %1700 = vmatpush1.bf16.xpose.msra.mxu0 %v1663
        %1701 = vmatprep.subr.bf16.mxu0 0
        %1702 = vmatpush1.bf16.xpose.msra.mxu0 %v1660
        %1703 = vmatprep.subr.bf16.mxu0 0
        %1704 = vmatpush1.bf16.xpose.msra.mxu0 %v1657
        %1705 = vmatprep.subr.bf16.mxu0 0
        %1706 = vmatpush1.bf16.xpose.msra.mxu0 %v1654
        %1707 = vmatprep.subr.bf16.mxu0 0
        %1708 = vmatpush1.bf16.xpose.msra.mxu0 %v1651
        %1709 = vmatprep.subr.bf16.mxu0 0
        %1710 = vmatpush1.bf16.xpose.msra.mxu0 %v1648
        %1711 = vmatprep.subr.bf16.mxu0 0
        %1712 = vmatpush2.bf16.xpose.msra.mxu0 %v1693
        %1713 = vmatprep.subr.bf16.mxu0 0
        %1714 = vmatpush2.bf16.xpose.msra.mxu0 %v1690
        %1715 = vmatprep.subr.bf16.mxu0 0
        %1716 = vmatpush2.bf16.xpose.msra.mxu0 %v1687
        %1717 = vmatprep.subr.bf16.mxu0 0
        %1718 = vmatpush2.bf16.xpose.msra.mxu0 %v1684
        %1719 = vmatprep.subr.bf16.mxu0 0
        %1720 = vmatpush2.bf16.xpose.msra.mxu0 %v1681
        %1721 = vmatprep.subr.bf16.mxu0 0
        %1722 = vmatpush2.bf16.xpose.msra.mxu0 %v1678
        %1723 = vmatprep.subr.bf16.mxu0 0
        %1724 = vmatpush2.bf16.xpose.msra.mxu0 %v1675
        %1725 = vmatprep.subr.bf16.mxu0 0
        %1726 = vmatpush2.bf16.xpose.msra.mxu0 %v1672
        %1727 = vmatprep.mubr.bf16.mxu0 0
        %1728 = vmatmul.mubr.bf16.gmra.mxu0 %v1645
        %v1729 = vpop.f32.mrf.mxu0
        %v1730 = vadd.f32 %v1643, %v1729
        %v1731 = vpop.f32.mrf.mxu0
        %v1732 = vadd.f32 %v1643, %v1731
        %v1733 = vpop.f32.mrf.mxu0
        %v1734 = vpop.f32.mrf.mxu0
        %1735 = vdwg.mxu0
        %v1736 = vxor.u32 %v1730, 2147483648
        %v1737 = vxor.u32 %v1732, 2147483648
        %v1738 = vmul.f32 %v1736, 1.442695
        %v1739 = vpow.pop %v1738
        %v1740 = vmul.f32 %v1737, 1.442695
        %v1741 = vpow.pop %v1740
        %v1742 = vadd.f32 %v1739, 1.0
        %v1743 = vadd.f32 %v1741, 1.0
        %v1744 = vrcp.pop %v1742
        %v1745 = vmul.f32 1.0, %v1744
        %v1746 = vrcp.pop %v1743
        %v1747 = vmul.f32 1.0, %v1746
        %v1750 = vcombine.low %v1745, %v1747
        %v1752 = vunpack.c.l.s4 1966171168
        %v1753 = vunpack.c.0.s8 %v1752
        %v1754 = vlaneseq
        %v1755 = vshrl.u32 %v1754, 7
        %v1756 = vsub.s32 %v1753, %v1755
        %v1757 = vrot.slane %v1750, %v1756
        %v1759 = vunpack.c.l.s4 1966171168
        %v1760 = vunpack.c.0.s8 %v1759
        %v1761 = vlaneseq
        %v1762 = vshrl.u32 %v1761, 7
        %v1763 = vsub.s32 %v1760, %v1762
        %v1764 = vrot.slane %v1757, %v1763
        %v1766 = vlaneseq
        %vm1767 = vcmp.ge.s32.totalorder %v1766, 0
        %vm1768 = vcmp.lt.s32.totalorder %v1766, 256
        %vm1769 = vmand %vm1767, %vm1768
        %1770 = vst.msk [vmem:[%s398] sm:$0x3] %vm1769, %v1764
        %s1771 = sand.u32 %s276, 1
        %s1772 = scalar_lea.sflag [#allocation4], %s1771
        %s1773 = sand.u32 %s276, 1
        %s1774 = smul.addr %s1773, 2
        %s1775 = scalar_lea.vmem [#allocation3], %s1774
        // Predicated region
        $region65: #{tpu_custom_call.1} parent=63 // pred_check
          %p1776 = pneg %p286
        $region66: #{tpu_custom_call.1} parent=63 // pred_check_branch
          %1778 = sbr.rel (%p1776) target = $region68
        $region67: #{tpu_custom_call.1} parent=63 // pred_region
          %s1779 = smul.u32 2, %s27
          %s1781 = ssub.s32 32, 32
          %1782 = vsyncadd %s1772, %s1781
          %s1783 = smul.addr %s1779, 16
          %s1784 = scalar_lea.hbm %s11, %s1783
          %s1786 = sshll.u32 %s1775, 4
          %s1787 = int_to_ptr.vmem [resolvable:$true] %s1786
          %1789 = dma.vmem_to_hbm [thread:$0]  %s1787, 32, %s1784, %s1772
        $region68: #{tpu_custom_call.1} parent=63 // pred_fallthru
          _
      $region64: #{tpu_custom_call.1} parent=5 // pred_fallthru
        _
      %p1790 = scmp.le.s32.totalorder 2, %s22
      // Predicated region
      $region69: #{tpu_custom_call.1} parent=5 // pred_check
        %p1791 = pneg %p1790
      $region70: #{tpu_custom_call.1} parent=5 // pred_check_branch
        %1793 = sbr.rel (%p1791) target = $region72
      $region71: #{tpu_custom_call.1} parent=5 // pred_region
        %s1794 = ssub.s32 %s22, 2
        // Predicated region
        $region73: #{tpu_custom_call.1} parent=71 // pred_check
          %p1795 = pneg %p292
        $region74: #{tpu_custom_call.1} parent=71 // pred_check_branch
          %1797 = sbr.rel (%p1795) target = $region76
        $region75: #{tpu_custom_call.1} parent=71 // pred_region
          %s1798 = sand.u32 %s277, 1
          %s1799 = scalar_lea.sflag [#allocation4], %s1798
          %s1800 = sand.u32 %s277, 1
          %s1801 = smul.addr %s1800, 2
          %s1802 = scalar_lea.vmem [#allocation3], %s1801
          %1803 = dma.done %s1799, 32
        $region76: #{tpu_custom_call.1} parent=71 // pred_fallthru
          _
      $region72: #{tpu_custom_call.1} parent=5 // pred_fallthru
        _
    $region6: #{tpu_custom_call.1} parent=1 // loop_footer
      %s26 = sadd.s32 1, %s22
    $region7: #{tpu_custom_call.1} parent=1 // loop_footer_branch
      %21 = sbr.rel target = $region3
    $region8: #{tpu_custom_call.1} parent=1 // loop_exit
      _
    %1804 = vsyncpa [#allocation4], 1
    %s1805 = scalar_lea.sflag [#allocation4], 1
    %1806 = vsyncpa %s1805, 1

</llo_original>
